<compile_context>
chip_gen: v7x
topology: tpu7x:2x2x1
jax: 0.10.0
libtpu: 0.0.40
codegen_flags: <defaults>
</compile_context>

<pallas_src>
import functools

import jax
import jax.numpy as jnp
from jax.experimental import pallas as pl
from jax.experimental.pallas import tpu as pltpu


def _round_up(x, m):
    return ((x + m - 1) // m) * m


def _dsconv_kernel(xa_ref, xb_ref, w_ref, b_ref, out_ref, xbuf_ref, *, width, chans):
    """Fused depthwise(3x3, valid) + pointwise(1x1) for one row tile of one image.

    xa_ref  : (TR, C)       flattened (H*W, C) input rows [t*TR, t*TR+TR)
    xb_ref  : (HB, C)       halo rows immediately following block A (HB >= 2*W+2)
    w_ref   : (9*C, O_pad)  combined weight  Wc[(di*3+dj)*C + c, o] = dw[c,di,dj]*pw[o,c]
    b_ref   : (1, O_pad)    pointwise bias (zero padded to O_pad)
    out_ref : (TR, O_pad)   flattened output rows; columns j >= W-2 are garbage (cropped later)
    xbuf_ref: (TR+HB, C)    f32 VMEM scratch holding the contiguous input rows for this tile
    """
    TR = xa_ref.shape[0]
    HB = xb_ref.shape[0]
    O_pad = out_ref.shape[-1]

    # Stage the TR + HB contiguous flattened input rows into one buffer (aligned stores).
    xbuf_ref[0:TR, :] = xa_ref[...].astype(jnp.float32)
    xbuf_ref[TR:TR + HB, :] = xb_ref[...].astype(jnp.float32)

    # 9 accumulated 2D MXU matmuls against the combined (depthwise*pointwise) weight.
    # Each tap is just a sublane-shifted ref load of the staged slab — no VPU depthwise pass,
    # no reshapes, no unaligned lane concatenation.
    acc = jnp.zeros((TR, O_pad), dtype=jnp.float32)
    for di in range(3):
        for dj in range(3):
            t = di * 3 + dj
            off = di * width + dj                                   # flattened tap shift
            lhs = xbuf_ref[off:off + TR, :]                         # (TR, C) f32
            rhs = w_ref[t * chans:(t + 1) * chans, :].astype(jnp.float32)  # (C, O_pad)
            acc += jnp.dot(lhs, rhs, preferred_element_type=jnp.float32)

    out_ref[...] = (acc + b_ref[...].astype(jnp.float32)).astype(out_ref.dtype)


def depthwise_separable_conv2d(x_nchw, dw_weight, pw_weight, pw_bias, *, row_tile=128):
    """x_nchw: (N, C, H, W), dw_weight: (C, 1, 3, 3), pw_weight: (O, C, 1, 1), pw_bias: (O,).
    Returns (N, O, H-2, W-2) — identical semantics to the PyTorch module (padding=0,
    depthwise bias=False, pointwise bias=True)."""
    N, C, H, W = x_nchw.shape
    O = pw_weight.shape[0]
    Ho, Wo = H - 2, W - 2
    HW = H * W
    R_out = Ho * W                           # flattened output rows (last 2 cols/row cropped)
    O_pad = _round_up(O, 128)                # lane-dense output

    # Row-tile sizes: halo needed per tile is 2*W+2 flattened rows.
    halo = 2 * W + 2
    HB = _round_up(halo, 8)                  # halo block (sublane aligned)
    TR = max(1, row_tile // HB) * HB         # output row tile, multiple of HB (and of 8)
    n_tiles = pl.cdiv(R_out, TR)
    nb_halo = pl.cdiv(HW, HB)                # number of valid halo-block indices

    # ---- wrapper glue (see NOTE at top) ----
    x_flat = jnp.transpose(x_nchw, (0, 2, 3, 1)).reshape(N, HW, C)          # (N, H*W, C)

    # Exact depthwise+pointwise fusion into a single (9*C, O_pad) weight.
    dw = dw_weight[:, 0, :, :]                                              # (C, 3, 3)
    pw = pw_weight[:, :, 0, 0]                                              # (O, C)
    wc = jnp.einsum('cij,oc->ijco', dw, pw).reshape(9 * C, O)               # (9C, O)
    wc = jnp.pad(wc, ((0, 0), (0, O_pad - O))).astype(x_nchw.dtype)         # (9C, O_pad)
    bias = jnp.pad(pw_bias, (0, O_pad - O)).reshape(1, O_pad).astype(x_nchw.dtype)

    kernel = functools.partial(_dsconv_kernel, width=W, chans=C)

    out_flat = pl.pallas_call(
        kernel,
        out_shape=jax.ShapeDtypeStruct((N, R_out, O_pad), x_nchw.dtype),
        grid_spec=pltpu.PrefetchScalarGridSpec(
            num_scalar_prefetch=0,
            grid=(N, n_tiles),
            in_specs=[
                # block A: TR flattened rows of this tile
                pl.BlockSpec((None, TR, C), lambda n, t: (n, t, 0)),
                # block B: HB halo rows right after block A (clamped for the last tile;
                # clamped/garbage rows are only ever used by cropped/dropped outputs)
                pl.BlockSpec(
                    (None, HB, C),
                    lambda n, t: (n, jnp.minimum((t + 1) * (TR // HB), nb_halo - 1), 0)),
                # combined weight + bias: resident across the whole grid
                pl.BlockSpec((9 * C, O_pad), lambda n, t: (0, 0)),
                pl.BlockSpec((1, O_pad), lambda n, t: (0, 0)),
            ],
            out_specs=pl.BlockSpec((None, TR, O_pad), lambda n, t: (n, t, 0)),
            scratch_shapes=[pltpu.VMEM((TR + HB, C), jnp.float32)],
        ),
        compiler_params=pltpu.CompilerParams(
            dimension_semantics=("parallel", "parallel"),
            vmem_limit_bytes=32 * 1024 * 1024,
        ),
    )(x_flat, x_flat, wc, bias)

    # Un-flatten, crop the 2 wrap-around columns and the O padding, return NCHW.
    out = out_flat.reshape(N, Ho, W, O_pad)[:, :, :Wo, :O]
    return jnp.transpose(out, (0, 3, 1, 2))


def _reference(x_nchw, dw_weight, pw_weight, pw_bias):
    """Pure-JAX reference matching nn.Conv2d semantics."""
    N, C, H, W = x_nchw.shape
    Ho, Wo = H - 2, W - 2
    acc = jnp.zeros((N, C, Ho, Wo), dtype=jnp.float32)
    for di in range(3):
        for dj in range(3):
            acc = acc + (x_nchw[:, :, di:di + Ho, dj:dj + Wo]
                         * dw_weight[None, :, 0, di, dj, None, None])
    out = jnp.einsum('nchw,oc->nohw', acc, pw_weight[:, :, 0, 0])
    return out + pw_bias[None, :, None, None]


if __name__ == "__main__":
    key = jax.random.PRNGKey(0)
    k_x, k_dw, k_pw, k_pb = jax.random.split(key, 4)

    N, C_in, C_out, H, W = 2, 4, 8, 16, 16
    x = jax.random.normal(k_x, (N, C_in, H, W), dtype=jnp.float32)
    # deterministic synthetic parameters (shapes follow nn.Conv2d in __init__)
    dw_weight = jax.random.normal(k_dw, (C_in, 1, 3, 3), dtype=jnp.float32) * 0.1
    pw_weight = jax.random.normal(k_pw, (C_out, C_in, 1, 1), dtype=jnp.float32) * 0.1
    pw_bias = jax.random.normal(k_pb, (C_out,), dtype=jnp.float32) * 0.1

    out = depthwise_separable_conv2d(x, dw_weight, pw_weight, pw_bias)
    out = jax.block_until_ready(out)

    ref = _reference(x, dw_weight, pw_weight, pw_bias)
    assert out.shape == (N, C_out, H - 2, W - 2), out.shape
    max_err = float(jnp.max(jnp.abs(out - ref)))
    assert max_err < 1e-4, max_err

    print("KERNEL_OK")
</pallas_src>

<mosaic_0001>
module attributes {stable_mosaic.version = 11 : i64} {
  func.func @_dsconv_kernel(%arg0: i32, %arg1: i32, %arg2: memref<1x120x4xf32, #tpu.memory_space<vmem>>, %arg3: memref<1x40x4xf32, #tpu.memory_space<vmem>>, %arg4: memref<36x128xf32, #tpu.memory_space<vmem>>, %arg5: memref<1x128xf32, #tpu.memory_space<vmem>>, %arg6: memref<1x120x128xf32, #tpu.memory_space<vmem>>, %arg7: memref<160x4xf32, #tpu.memory_space<vmem>>) attributes {dimension_semantics = [#tpu.dimension_semantics<parallel>, #tpu.dimension_semantics<parallel>], iteration_bounds = array<i64: 2, 2>, scalar_prefetch = 0 : i64, scratch_operands = 1 : i64, tpu.core_type = #tpu.core_type<tc>, window_params = [{transform_indices = @transform_0, window_bounds = array<i64: 1, 120, 4>}, {transform_indices = @transform_1, window_bounds = array<i64: 1, 40, 4>}, {pipeline_mode = #tpu.pipeline_mode<synchronous>, transform_indices = @transform_2, window_bounds = array<i64: 36, 128>}, {pipeline_mode = #tpu.pipeline_mode<synchronous>, transform_indices = @transform_3, window_bounds = array<i64: 1, 128>}, {transform_indices = @transform_4, window_bounds = array<i64: 1, 120, 128>}]} {
    %c0 = arith.constant 0 : index
    %c0_0 = arith.constant 0 : index
    %c0_1 = arith.constant 0 : index
    %0 = vector.load %arg2[%c0, %c0_0, %c0_1] : memref<1x120x4xf32, #tpu.memory_space<vmem>>, vector<1x120x4xf32>
    %1 = vector.shape_cast %0 : vector<1x120x4xf32> to vector<120x4xf32>
    %c0_2 = arith.constant 0 : index
    %c0_3 = arith.constant 0 : index
    %2 = vector.load %arg7[%c0_2, %c0_3] : memref<160x4xf32, #tpu.memory_space<vmem>>, vector<120x4xf32>
    tpu.vector_store %arg7[%c0_2, %c0_3], %1 {strides = array<i32>} : memref<160x4xf32, #tpu.memory_space<vmem>>, vector<120x4xf32>,
    %c0_4 = arith.constant 0 : index
    %c0_5 = arith.constant 0 : index
    %c0_6 = arith.constant 0 : index
    %3 = vector.load %arg3[%c0_4, %c0_5, %c0_6] : memref<1x40x4xf32, #tpu.memory_space<vmem>>, vector<1x40x4xf32>
    %4 = vector.shape_cast %3 : vector<1x40x4xf32> to vector<40x4xf32>
    %c120 = arith.constant 120 : index
    %c0_7 = arith.constant 0 : index
    %5 = vector.load %arg7[%c120, %c0_7] : memref<160x4xf32, #tpu.memory_space<vmem>>, vector<40x4xf32>
    tpu.vector_store %arg7[%c120, %c0_7], %4 {strides = array<i32>} : memref<160x4xf32, #tpu.memory_space<vmem>>, vector<40x4xf32>,
    %cst = arith.constant 0.000000e+00 : f32
    %6 = vector.broadcast %cst : f32 to vector<120x128xf32>
    %c0_8 = arith.constant 0 : index
    %c0_9 = arith.constant 0 : index
    %7 = vector.load %arg7[%c0_8, %c0_9] : memref<160x4xf32, #tpu.memory_space<vmem>>, vector<120x4xf32>
    %c0_10 = arith.constant 0 : index
    %c0_11 = arith.constant 0 : index
    %8 = vector.load %arg4[%c0_10, %c0_11] : memref<36x128xf32, #tpu.memory_space<vmem>>, vector<4x128xf32>
    %cst_12 = arith.constant dense<0.000000e+00> : vector<120x128xf32>
    %9 = tpu.matmul %7, %8, %cst_12 {dimension_numbers = #tpu.dot_dimension_numbers<[1], [0], [0], [1], [0, 0, 1, 1], [], []>} : vector<120x4xf32>, vector<4x128xf32>, vector<120x128xf32> -> vector<120x128xf32>
    %10 = arith.addf %6, %9 : vector<120x128xf32>
    %c1 = arith.constant 1 : index
    %c0_13 = arith.constant 0 : index
    %11 = vector.load %arg7[%c1, %c0_13] : memref<160x4xf32, #tpu.memory_space<vmem>>, vector<120x4xf32>
    %c4 = arith.constant 4 : index
    %c0_14 = arith.constant 0 : index
    %12 = vector.load %arg4[%c4, %c0_14] : memref<36x128xf32, #tpu.memory_space<vmem>>, vector<4x128xf32>
    %cst_15 = arith.constant dense<0.000000e+00> : vector<120x128xf32>
    %13 = tpu.matmul %11, %12, %cst_15 {dimension_numbers = #tpu.dot_dimension_numbers<[1], [0], [0], [1], [0, 0, 1, 1], [], []>} : vector<120x4xf32>, vector<4x128xf32>, vector<120x128xf32> -> vector<120x128xf32>
    %14 = arith.addf %10, %13 : vector<120x128xf32>
    %c2 = arith.constant 2 : index
    %c0_16 = arith.constant 0 : index
    %15 = vector.load %arg7[%c2, %c0_16] : memref<160x4xf32, #tpu.memory_space<vmem>>, vector<120x4xf32>
    %c8 = arith.constant 8 : index
    %c0_17 = arith.constant 0 : index
    %16 = vector.load %arg4[%c8, %c0_17] : memref<36x128xf32, #tpu.memory_space<vmem>>, vector<4x128xf32>
    %cst_18 = arith.constant dense<0.000000e+00> : vector<120x128xf32>
    %17 = tpu.matmul %15, %16, %cst_18 {dimension_numbers = #tpu.dot_dimension_numbers<[1], [0], [0], [1], [0, 0, 1, 1], [], []>} : vector<120x4xf32>, vector<4x128xf32>, vector<120x128xf32> -> vector<120x128xf32>
    %18 = arith.addf %14, %17 : vector<120x128xf32>
    %c16 = arith.constant 16 : index
    %c0_19 = arith.constant 0 : index
    %19 = vector.load %arg7[%c16, %c0_19] : memref<160x4xf32, #tpu.memory_space<vmem>>, vector<120x4xf32>
    %c12 = arith.constant 12 : index
    %c0_20 = arith.constant 0 : index
    %20 = vector.load %arg4[%c12, %c0_20] : memref<36x128xf32, #tpu.memory_space<vmem>>, vector<4x128xf32>
    %cst_21 = arith.constant dense<0.000000e+00> : vector<120x128xf32>
    %21 = tpu.matmul %19, %20, %cst_21 {dimension_numbers = #tpu.dot_dimension_numbers<[1], [0], [0], [1], [0, 0, 1, 1], [], []>} : vector<120x4xf32>, vector<4x128xf32>, vector<120x128xf32> -> vector<120x128xf32>
    %22 = arith.addf %18, %21 : vector<120x128xf32>
    %c17 = arith.constant 17 : index
    %c0_22 = arith.constant 0 : index
    %23 = vector.load %arg7[%c17, %c0_22] : memref<160x4xf32, #tpu.memory_space<vmem>>, vector<120x4xf32>
    %c16_23 = arith.constant 16 : index
    %c0_24 = arith.constant 0 : index
    %24 = vector.load %arg4[%c16_23, %c0_24] : memref<36x128xf32, #tpu.memory_space<vmem>>, vector<4x128xf32>
    %cst_25 = arith.constant dense<0.000000e+00> : vector<120x128xf32>
    %25 = tpu.matmul %23, %24, %cst_25 {dimension_numbers = #tpu.dot_dimension_numbers<[1], [0], [0], [1], [0, 0, 1, 1], [], []>} : vector<120x4xf32>, vector<4x128xf32>, vector<120x128xf32> -> vector<120x128xf32>
    %26 = arith.addf %22, %25 : vector<120x128xf32>
    %c18 = arith.constant 18 : index
    %c0_26 = arith.constant 0 : index
    %27 = vector.load %arg7[%c18, %c0_26] : memref<160x4xf32, #tpu.memory_space<vmem>>, vector<120x4xf32>
    %c20 = arith.constant 20 : index
    %c0_27 = arith.constant 0 : index
    %28 = vector.load %arg4[%c20, %c0_27] : memref<36x128xf32, #tpu.memory_space<vmem>>, vector<4x128xf32>
    %cst_28 = arith.constant dense<0.000000e+00> : vector<120x128xf32>
    %29 = tpu.matmul %27, %28, %cst_28 {dimension_numbers = #tpu.dot_dimension_numbers<[1], [0], [0], [1], [0, 0, 1, 1], [], []>} : vector<120x4xf32>, vector<4x128xf32>, vector<120x128xf32> -> vector<120x128xf32>
    %30 = arith.addf %26, %29 : vector<120x128xf32>
    %c32 = arith.constant 32 : index
    %c0_29 = arith.constant 0 : index
    %31 = vector.load %arg7[%c32, %c0_29] : memref<160x4xf32, #tpu.memory_space<vmem>>, vector<120x4xf32>
    %c24 = arith.constant 24 : index
    %c0_30 = arith.constant 0 : index
    %32 = vector.load %arg4[%c24, %c0_30] : memref<36x128xf32, #tpu.memory_space<vmem>>, vector<4x128xf32>
    %cst_31 = arith.constant dense<0.000000e+00> : vector<120x128xf32>
    %33 = tpu.matmul %31, %32, %cst_31 {dimension_numbers = #tpu.dot_dimension_numbers<[1], [0], [0], [1], [0, 0, 1, 1], [], []>} : vector<120x4xf32>, vector<4x128xf32>, vector<120x128xf32> -> vector<120x128xf32>
    %34 = arith.addf %30, %33 : vector<120x128xf32>
    %c33 = arith.constant 33 : index
    %c0_32 = arith.constant 0 : index
    %35 = vector.load %arg7[%c33, %c0_32] : memref<160x4xf32, #tpu.memory_space<vmem>>, vector<120x4xf32>
    %c28 = arith.constant 28 : index
    %c0_33 = arith.constant 0 : index
    %36 = vector.load %arg4[%c28, %c0_33] : memref<36x128xf32, #tpu.memory_space<vmem>>, vector<4x128xf32>
    %cst_34 = arith.constant dense<0.000000e+00> : vector<120x128xf32>
    %37 = tpu.matmul %35, %36, %cst_34 {dimension_numbers = #tpu.dot_dimension_numbers<[1], [0], [0], [1], [0, 0, 1, 1], [], []>} : vector<120x4xf32>, vector<4x128xf32>, vector<120x128xf32> -> vector<120x128xf32>
    %38 = arith.addf %34, %37 : vector<120x128xf32>
    %c34 = arith.constant 34 : index
    %c0_35 = arith.constant 0 : index
    %39 = vector.load %arg7[%c34, %c0_35] : memref<160x4xf32, #tpu.memory_space<vmem>>, vector<120x4xf32>
    %c32_36 = arith.constant 32 : index
    %c0_37 = arith.constant 0 : index
    %40 = vector.load %arg4[%c32_36, %c0_37] : memref<36x128xf32, #tpu.memory_space<vmem>>, vector<4x128xf32>
    %cst_38 = arith.constant dense<0.000000e+00> : vector<120x128xf32>
    %41 = tpu.matmul %39, %40, %cst_38 {dimension_numbers = #tpu.dot_dimension_numbers<[1], [0], [0], [1], [0, 0, 1, 1], [], []>} : vector<120x4xf32>, vector<4x128xf32>, vector<120x128xf32> -> vector<120x128xf32>
    %42 = arith.addf %38, %41 : vector<120x128xf32>
    %c0_39 = arith.constant 0 : index
    %c0_40 = arith.constant 0 : index
    %43 = vector.load %arg5[%c0_39, %c0_40] : memref<1x128xf32, #tpu.memory_space<vmem>>, vector<1x128xf32>
    %44 = vector.broadcast %43 : vector<1x128xf32> to vector<120x128xf32>
    %45 = arith.addf %42, %44 : vector<120x128xf32>
    %c0_41 = arith.constant 0 : index
    %c0_42 = arith.constant 0 : index
    %c0_43 = arith.constant 0 : index
    %46 = vector.load %arg6[%c0_41, %c0_42, %c0_43] : memref<1x120x128xf32, #tpu.memory_space<vmem>>, vector<1x120x128xf32>
    %47 = vector.shape_cast %46 : vector<1x120x128xf32> to vector<120x128xf32>
    %48 = vector.shape_cast %45 : vector<120x128xf32> to vector<1x120x128xf32>
    tpu.vector_store %arg6[%c0_41, %c0_42, %c0_43], %48 {strides = array<i32>} : memref<1x120x128xf32, #tpu.memory_space<vmem>>, vector<1x120x128xf32>,
    return
  }
  func.func @transform_0(%arg0: i32, %arg1: i32) -> (i32, i32, i32) {
    %c0_i32 = arith.constant 0 : i32
    %c0_i32_0 = arith.constant 0 : i32
    return %arg0, %arg1, %c0_i32 : i32, i32, i32
  }
  func.func @transform_1(%arg0: i32, %arg1: i32) -> (i32, i32, i32) {
    %c1_i32 = arith.constant 1 : i32
    %0 = arith.addi %arg1, %c1_i32 : i32
    %c3_i32 = arith.constant 3 : i32
    %1 = arith.muli %0, %c3_i32 : i32
    %c6_i32 = arith.constant 6 : i32
    %2 = arith.minsi %1, %c6_i32 : i32
    %c0_i32 = arith.constant 0 : i32
    %c0_i32_0 = arith.constant 0 : i32
    return %arg0, %2, %c0_i32 : i32, i32, i32
  }
  func.func @transform_2(%arg0: i32, %arg1: i32) -> (i32, i32) {
    %c0_i32 = arith.constant 0 : i32
    %c0_i32_0 = arith.constant 0 : i32
    %c0_i32_1 = arith.constant 0 : i32
    return %c0_i32, %c0_i32_0 : i32, i32
  }
  func.func @transform_3(%arg0: i32, %arg1: i32) -> (i32, i32) {
    %c0_i32 = arith.constant 0 : i32
    %c0_i32_0 = arith.constant 0 : i32
    %c0_i32_1 = arith.constant 0 : i32
    return %c0_i32, %c0_i32_0 : i32, i32
  }
  func.func @transform_4(%arg0: i32, %arg1: i32) -> (i32, i32, i32) {
    %c0_i32 = arith.constant 0 : i32
    %c0_i32_0 = arith.constant 0 : i32
    return %arg0, %arg1, %c0_i32 : i32, i32, i32
  }
}

</mosaic_0001>

<llo_original>
// kernel: tpu_custom_call.1
$region0: #{tpu_custom_call.1}
  #allocation0 [shape = 'u32[]', space=smem, size = 0x4, offset = 0x4, fixed_abs, tag = 'smem constant byte address 0x4 - core index']
  #allocation1 [shape = 'u32[144,128]{1,0:T(1,128)}', space=vmem, size = 0x12000, scoped, tag = 'internal scratch']
  #allocation2 [shape = 'f32[160,4]{1,0:T(8,128)}', space=vmem, size = 0x14000, scoped, tag = 'scratch operand']
  %s0 = inlined_call_operand.vmem [shape: f32[2,256,4], index: 0, kind: input, shape index: {}]
  %s1 = inlined_call_operand.vmem [shape: f32[2,256,4], index: 1, kind: input, shape index: {}]
  %s2 = inlined_call_operand.vmem [shape: f32[36,128], index: 2, kind: input, shape index: {}]
  %s3 = inlined_call_operand.vmem [shape: f32[1,128], index: 3, kind: input, shape index: {}]
  %s4 = inlined_call_operand.hbm [shape: f32[2,224,128], index: 4, kind: output, shape index: {}]
  %s5 = sld [smem:[#allocation0]]
  $region49: #{tpu_custom_call.1} parent=0
    _
  %s7 = ssub.s32 1, %s5
  %s8 = scalar_select 0, %s7, %s5
  $region1: #{tpu_custom_call.1} parent=0
    #allocation3 [shape = 'u8[122880]{0}', space=vmem, size = 0x1e000, scoped, tag = 'output window, operand 0']
    #allocation4 [shape = 's32[2]{0}', space=sflag, size = 0x8, scoped, tag = 'scoped memory for tpu_custom_call.1']
    %9 = vsyncpa [#allocation4], 0
    %s10 = scalar_lea.sflag [#allocation4], 1
    %11 = vsyncpa %s10, 0
    loop: start=0, step=1, limit=6
    $region2: #{tpu_custom_call.1} parent=1 // loop_pre_header
      _
    $region3: #{tpu_custom_call.1} parent=1 // loop_header
      %s13 = sphi 0, %s17
      %p14 = scmp.ge.s32.totalorder %s13, 6
      %s20 = sphi 0, %s32
      %s21 = sphi 0, %s28
      %s22 = sphi 0, %s20
      %s23 = sphi 0, %s21
      %s24 = sphi 0, %s22
      %s25 = sphi 0, %s23
      %s37 = sphi 0, %s39
      %s40 = sphi 0, %s37
      %s41 = sphi 0, %s40
      %s57 = sphi 0, %s41
      %s73 = sphi 0, %s75
      %s76 = sphi 0, %s73
      %s77 = sphi 0, %s76
      %s93 = sphi 0, %s77
      %s97 = sphi 0, %s97
      %s99 = sphi 0, %s97
      %s100 = sphi 0, %s99
      %s114 = sphi 0, %s100
      %s118 = sphi 0, %s118
      %s120 = sphi 0, %s118
      %s121 = sphi 0, %s120
      %s135 = sphi 0, %s121
      %s143 = sphi 0, %s145
      %s146 = sphi 0, %s143
      %s147 = sphi 0, %s146
      %s163 = sphi 0, %s147
    $region4: #{tpu_custom_call.1} parent=1 // loop_header_branch
      %16 = sbr.rel (%p14) target = $region8
    $region5: #{tpu_custom_call.1} parent=1 // loop_body
      %s18 = ssub.s32 %s13, 1
      %s19 = ssub.s32 %s13, 2
      %s26 = sadd.s32 1, %s21
      %p27 = scmp.ge.s32.totalorder %s26, 2
      %s28 = scalar_select %p27, 0, %s26
      %s29 = sadd.s32 1, %s20
      %s30 = scalar_select %p27, %s29, %s20
      %p31 = scmp.ge.s32.totalorder %s30, 2
      %s32 = scalar_select %p31, 0, %s30
      %s33 = ssub.s32 %s20, %s32
      %s34 = ssub.s32 %s21, %s28
      %s35 = sor.u32 %s33, %s34
      %p36 = scmp.eq.s32.totalorder %s35, 0
      %s38 = sadd.s32 %s37, 1
      %s39 = scalar_select %p36, %s37, %s38
      %p42 = pneg %p36
      %p43 = scmp.eq.s32.totalorder %s13, 3
      %p44 = por %p42, %p43
      %p45 = scmp.ne.s32.totalorder %s37, %s40
      %p46 = scmp.eq.s32.totalorder %s13, 0
      %p47 = por %p45, %p46
      %p48 = scmp.ne.s32.totalorder %s37, %s40
      %p49 = scmp.eq.s32.totalorder %s18, 3
      %p50 = por %p48, %p49
      %p51 = scmp.ne.s32.totalorder %s40, %s41
      %p52 = scmp.eq.s32.totalorder %s18, 0
      %p53 = por %p51, %p52
      %p54 = scmp.ne.s32.totalorder %s40, %s41
      %p55 = scmp.eq.s32.totalorder %s19, 3
      %p56 = por %p54, %p55
      %p58 = scmp.ne.s32.totalorder %s41, %s57
      %p59 = scmp.eq.s32.totalorder %s19, 0
      %p60 = por %p58, %p59
      %s61 = sadd.s32 %s21, 1
      %s62 = smul.u32 %s61, 3
      %p63 = scmp.lt.s32.totalorder %s62, 6
      %s64 = scalar_select %p63, %s62, 6
      %s65 = sadd.s32 %s28, 1
      %s66 = smul.u32 %s65, 3
      %p67 = scmp.lt.s32.totalorder %s66, 6
      %s68 = scalar_select %p67, %s66, 6
      %s69 = ssub.s32 %s20, %s32
      %s70 = ssub.s32 %s64, %s68
      %s71 = sor.u32 %s69, %s70
      %p72 = scmp.eq.s32.totalorder %s71, 0
      %s74 = sadd.s32 %s73, 1
      %s75 = scalar_select %p72, %s73, %s74
      %p78 = pneg %p72
      %p79 = scmp.eq.s32.totalorder %s13, 3
      %p80 = por %p78, %p79
      %p81 = scmp.ne.s32.totalorder %s73, %s76
      %p82 = scmp.eq.s32.totalorder %s13, 0
      %p83 = por %p81, %p82
      %p84 = scmp.ne.s32.totalorder %s73, %s76
      %p85 = scmp.eq.s32.totalorder %s18, 3
      %p86 = por %p84, %p85
      %p87 = scmp.ne.s32.totalorder %s76, %s77
      %p88 = scmp.eq.s32.totalorder %s18, 0
      %p89 = por %p87, %p88
      %p90 = scmp.ne.s32.totalorder %s76, %s77
      %p91 = scmp.eq.s32.totalorder %s19, 3
      %p92 = por %p90, %p91
      %p94 = scmp.ne.s32.totalorder %s77, %s93
      %p95 = scmp.eq.s32.totalorder %s19, 0
      %p96 = por %p94, %p95
      %s98 = sadd.s32 %s97, 1
      %p101 = scmp.eq.s32.totalorder %s13, 3
      %p102 = scmp.ne.s32.totalorder %s97, %s99
      %p103 = scmp.eq.s32.totalorder %s13, 0
      %p104 = por %p102, %p103
      %p105 = scmp.ne.s32.totalorder %s97, %s99
      %p106 = scmp.eq.s32.totalorder %s18, 3
      %p107 = por %p105, %p106
      %p108 = scmp.ne.s32.totalorder %s99, %s100
      %p109 = scmp.eq.s32.totalorder %s18, 0
      %p110 = por %p108, %p109
      %p111 = scmp.ne.s32.totalorder %s99, %s100
      %p112 = scmp.eq.s32.totalorder %s19, 3
      %p113 = por %p111, %p112
      %p115 = scmp.ne.s32.totalorder %s100, %s114
      %p116 = scmp.eq.s32.totalorder %s19, 0
      %p117 = por %p115, %p116
      %s119 = sadd.s32 %s118, 1
      %p122 = scmp.eq.s32.totalorder %s13, 3
      %p123 = scmp.ne.s32.totalorder %s118, %s120
      %p124 = scmp.eq.s32.totalorder %s13, 0
      %p125 = por %p123, %p124
      %p126 = scmp.ne.s32.totalorder %s118, %s120
      %p127 = scmp.eq.s32.totalorder %s18, 3
      %p128 = por %p126, %p127
      %p129 = scmp.ne.s32.totalorder %s120, %s121
      %p130 = scmp.eq.s32.totalorder %s18, 0
      %p131 = por %p129, %p130
      %p132 = scmp.ne.s32.totalorder %s120, %s121
      %p133 = scmp.eq.s32.totalorder %s19, 3
      %p134 = por %p132, %p133
      %p136 = scmp.ne.s32.totalorder %s121, %s135
      %p137 = scmp.eq.s32.totalorder %s19, 0
      %p138 = por %p136, %p137
      %s139 = ssub.s32 %s20, %s32
      %s140 = ssub.s32 %s21, %s28
      %s141 = sor.u32 %s139, %s140
      %p142 = scmp.eq.s32.totalorder %s141, 0
      %s144 = sadd.s32 %s143, 1
      %s145 = scalar_select %p142, %s143, %s144
      %p148 = pneg %p142
      %p149 = scmp.eq.s32.totalorder %s13, 3
      %p150 = por %p148, %p149
      %p151 = scmp.ne.s32.totalorder %s143, %s146
      %p152 = scmp.eq.s32.totalorder %s13, 0
      %p153 = por %p151, %p152
      %p154 = scmp.ne.s32.totalorder %s143, %s146
      %p155 = scmp.eq.s32.totalorder %s18, 3
      %p156 = por %p154, %p155
      %p157 = scmp.ne.s32.totalorder %s146, %s147
      %p158 = scmp.eq.s32.totalorder %s18, 0
      %p159 = por %p157, %p158
      %p160 = scmp.ne.s32.totalorder %s146, %s147
      %p161 = scmp.eq.s32.totalorder %s19, 3
      %p162 = por %p160, %p161
      %p164 = scmp.ne.s32.totalorder %s147, %s163
      %p165 = scmp.eq.s32.totalorder %s19, 0
      %p166 = por %p164, %p165
      %p167 = scmp.le.s32.totalorder 1, %s13
      %p168 = scmp.lt.s32.totalorder %s13, 5
      %p169 = pnand %p167, %p168
      %p170 = pneg %p169
      // Predicated region
      $region9: #{tpu_custom_call.1} parent=5 // pred_check
        _
      $region10: #{tpu_custom_call.1} parent=5 // pred_check_branch
        %172 = sbr.rel (%p169) target = $region12
      $region11: #{tpu_custom_call.1} parent=5 // pred_region
        %s173 = ssub.s32 %s13, 1
        // Predicated region
        $region13: #{tpu_custom_call.1} parent=11 // pred_check
          %p174 = pneg %p110
        $region14: #{tpu_custom_call.1} parent=11 // pred_check_branch
          %176 = sbr.rel (%p174) target = $region16
        $region15: #{tpu_custom_call.1} parent=11 // pred_region
          _
        $region16: #{tpu_custom_call.1} parent=11 // pred_fallthru
          _
        // Predicated region
        $region17: #{tpu_custom_call.1} parent=11 // pred_check
          %p177 = pneg %p131
        $region18: #{tpu_custom_call.1} parent=11 // pred_check_branch
          %179 = sbr.rel (%p177) target = $region20
        $region19: #{tpu_custom_call.1} parent=11 // pred_region
          _
        $region20: #{tpu_custom_call.1} parent=11 // pred_fallthru
          _
      $region12: #{tpu_custom_call.1} parent=5 // pred_fallthru
        _
      %p180 = scmp.lt.s32.totalorder %s13, 4
      // Predicated region
      $region21: #{tpu_custom_call.1} parent=5 // pred_check
        %p181 = pneg %p180
      $region22: #{tpu_custom_call.1} parent=5 // pred_check_branch
        %183 = sbr.rel (%p181) target = $region24
      $region23: #{tpu_custom_call.1} parent=5 // pred_region
        // Predicated region
        $region25: #{tpu_custom_call.1} parent=23 // pred_check
          %p184 = pneg %p47
        $region26: #{tpu_custom_call.1} parent=23 // pred_check_branch
          %186 = sbr.rel (%p184) target = $region28
        $region27: #{tpu_custom_call.1} parent=23 // pred_region
          %s187 = smul.u32 15, %s21
          %s188 = ssub.s32 32, %s187
          %p189 = scmp.lt.s32.totalorder %s188, 15
          %s190 = scalar_select %p189, %s188, 15
          %s191 = smul.u32 128, %s190
          %p192 = scmp.lt.s32.totalorder %s20, 1
          %s193 = scalar_select %p192, %s20, 1
          %p194 = scmp.lt.s32.totalorder %s187, 31
          %s195 = scalar_select %p194, %s187, 31
          %s196 = smul.addr %s193, 32
          %s197 = sadd.s32 %s195, %s196
          %s198 = smul.addr %s197, 8
          %s199 = scalar_lea.vmem %s0, %s198
          %s200 = smul.u32 15, %s21
          %s201 = ssub.s32 32, %s200
          %p202 = scmp.lt.s32.totalorder %s201, 15
          %s203 = scalar_select %p202, %s201, 15
          %s204 = smul.u32 128, %s203
        $region28: #{tpu_custom_call.1} parent=23 // pred_fallthru
          _
        // Predicated region
        $region29: #{tpu_custom_call.1} parent=23 // pred_check
          %p205 = pneg %p83
        $region30: #{tpu_custom_call.1} parent=23 // pred_check_branch
          %207 = sbr.rel (%p205) target = $region32
        $region31: #{tpu_custom_call.1} parent=23 // pred_region
          %s208 = sadd.s32 %s21, 1
          %s209 = smul.u32 %s208, 3
          %p210 = scmp.lt.s32.totalorder %s209, 6
          %s211 = scalar_select %p210, %s209, 6
          %s212 = smul.u32 5, %s211
          %s213 = ssub.s32 32, %s212
          %p214 = scmp.lt.s32.totalorder %s213, 5
          %s215 = scalar_select %p214, %s213, 5
          %s216 = smul.u32 128, %s215
          %p217 = scmp.lt.s32.totalorder %s20, 1
          %s218 = scalar_select %p217, %s20, 1
          %p219 = scmp.lt.s32.totalorder %s212, 31
          %s220 = scalar_select %p219, %s212, 31
          %s221 = smul.addr %s218, 32
          %s222 = sadd.s32 %s220, %s221
          %s223 = smul.addr %s222, 8
          %s224 = scalar_lea.vmem %s1, %s223
          %s225 = sadd.s32 %s21, 1
          %s226 = smul.u32 %s225, 3
          %p227 = scmp.lt.s32.totalorder %s226, 6
          %s228 = scalar_select %p227, %s226, 6
          %s229 = smul.u32 5, %s228
          %s230 = ssub.s32 32, %s229
          %p231 = scmp.lt.s32.totalorder %s230, 5
          %s232 = scalar_select %p231, %s230, 5
          %s233 = smul.u32 128, %s232
        $region32: #{tpu_custom_call.1} parent=23 // pred_fallthru
          _
      $region24: #{tpu_custom_call.1} parent=5 // pred_fallthru
        _
      %p234 = scmp.le.s32.totalorder 1, %s13
      %p235 = scmp.lt.s32.totalorder %s13, 5
      %p236 = pnand %p234, %p235
      %p237 = pneg %p236
      // Predicated region
      $region33: #{tpu_custom_call.1} parent=5 // pred_check
        _
      $region34: #{tpu_custom_call.1} parent=5 // pred_check_branch
        %239 = sbr.rel (%p236) target = $region36
      $region35: #{tpu_custom_call.1} parent=5 // pred_region
        %s240 = ssub.s32 %s13, 1
        %s241 = smul.u32 15, %s23
        %s242 = ssub.s32 32, %s241
        %p243 = scmp.lt.s32.totalorder %s242, 15
        %s244 = scalar_select %p243, %s242, 15
        %s245 = smul.u32 128, %s244
        %p246 = scmp.lt.s32.totalorder %s22, 1
        %s247 = scalar_select %p246, %s22, 1
        %p248 = scmp.lt.s32.totalorder %s241, 31
        %s249 = scalar_select %p248, %s241, 31
        %s250 = smul.addr %s247, 32
        %s251 = sadd.s32 %s249, %s250
        %s252 = smul.addr %s251, 8
        %s253 = scalar_lea.vmem %s0, %s252
        %p254 = pneg %p53
        %p255 = pneg %p50
        %s256 = sadd.s32 %s23, 1
        %s257 = smul.u32 %s256, 3
        %p258 = scmp.lt.s32.totalorder %s257, 6
        %s259 = scalar_select %p258, %s257, 6
        %s260 = smul.u32 5, %s259
        %s261 = ssub.s32 32, %s260
        %p262 = scmp.lt.s32.totalorder %s261, 5
        %s263 = scalar_select %p262, %s261, 5
        %s264 = smul.u32 128, %s263
        %p265 = scmp.lt.s32.totalorder %s22, 1
        %s266 = scalar_select %p265, %s22, 1
        %p267 = scmp.lt.s32.totalorder %s260, 31
        %s268 = scalar_select %p267, %s260, 31
        %s269 = smul.addr %s266, 32
        %s270 = sadd.s32 %s268, %s269
        %s271 = smul.addr %s270, 8
        %s272 = scalar_lea.vmem %s1, %s271
        %p273 = pneg %p89
        %p274 = pneg %p86
        %p275 = pneg %p110
        %p276 = pneg %p107
        %p277 = pneg %p131
        %p278 = pneg %p128
        %p279 = pneg %p159
        %p280 = pneg %p156
        %s281 = sand.u32 %s146, 1
        %s282 = scalar_lea.sflag [#allocation4], %s281
        %s283 = sand.u32 %s146, 1
        %s284 = smul.addr %s283, 120
        %s285 = scalar_lea.vmem [#allocation3], %s284
        %s286 = smul.u32 15, %s23
        %s287 = ssub.s32 32, %s286
        %p288 = scmp.lt.s32.totalorder %s287, 15
        %s289 = scalar_select %p288, %s287, 15
        %s290 = smul.u32 128, %s289
        %p291 = scmp.lt.s32.totalorder %s22, 1
        %s292 = scalar_select %p291, %s22, 1
        %p293 = scmp.lt.s32.totalorder %s286, 31
        %s294 = scalar_select %p293, %s286, 31
        %s295 = smul.addr %s292, 32
        %s296 = sadd.s32 %s294, %s295
        %s297 = smul.addr %s296, 8
        %s298 = scalar_lea.vmem %s0, %s297
        %s299 = smul.u32 15, %s23
        %s300 = ssub.s32 32, %s299
        %p301 = scmp.lt.s32.totalorder %s300, 15
        %s302 = scalar_select %p301, %s300, 15
        %s303 = smul.u32 128, %s302
        %s304 = sadd.s32 %s23, 1
        %s305 = smul.u32 %s304, 3
        %p306 = scmp.lt.s32.totalorder %s305, 6
        %s307 = scalar_select %p306, %s305, 6
        %s308 = smul.u32 5, %s307
        %s309 = ssub.s32 32, %s308
        %p310 = scmp.lt.s32.totalorder %s309, 5
        %s311 = scalar_select %p310, %s309, 5
        %s312 = smul.u32 128, %s311
        %p313 = scmp.lt.s32.totalorder %s22, 1
        %s314 = scalar_select %p313, %s22, 1
        %p315 = scmp.lt.s32.totalorder %s308, 31
        %s316 = scalar_select %p315, %s308, 31
        %s317 = smul.addr %s314, 32
        %s318 = sadd.s32 %s316, %s317
        %s319 = smul.addr %s318, 8
        %s320 = scalar_lea.vmem %s1, %s319
        %s321 = sadd.s32 %s23, 1
        %s322 = smul.u32 %s321, 3
        %p323 = scmp.lt.s32.totalorder %s322, 6
        %s324 = scalar_select %p323, %s322, 6
        %s325 = smul.u32 5, %s324
        %s326 = ssub.s32 32, %s325
        %p327 = scmp.lt.s32.totalorder %s326, 5
        %s328 = scalar_select %p327, %s326, 5
        %s329 = smul.u32 128, %s328
        %s330 = smul.u32 15, %s23
        %s331 = ssub.s32 28, %s330
        %p332 = scmp.lt.s32.totalorder %s331, 15
        %s333 = scalar_select %p332, %s331, 15
        %s334 = smul.u32 128, %s333
        %v335 = vld [vmem:[%s298] sm:$0xff]
        %v336 = vld [vmem:[%s298 + $0x8] sm:$0xff]
        %v337 = vld [vmem:[%s298 + $0x10] sm:$0xff]
        %v338 = vld [vmem:[%s298 + $0x18] sm:$0xff]
        %v339 = vld [vmem:[%s298 + $0x20] sm:$0xff]
        %v340 = vld [vmem:[%s298 + $0x28] sm:$0xff]
        %v341 = vld [vmem:[%s298 + $0x30] sm:$0xff]
        %v342 = vld [vmem:[%s298 + $0x38] sm:$0xff]
        %v343 = vld [vmem:[%s298 + $0x40] sm:$0xff]
        %v344 = vld [vmem:[%s298 + $0x48] sm:$0xff]
        %v345 = vld [vmem:[%s298 + $0x50] sm:$0xff]
        %v346 = vld [vmem:[%s298 + $0x58] sm:$0xff]
        %v347 = vld [vmem:[%s298 + $0x60] sm:$0xff]
        %v348 = vld [vmem:[%s298 + $0x68] sm:$0xff]
        %v349 = vld [vmem:[%s298 + $0x70] sm:$0xff]
        %vm350 = vcmask 31744
        %351 = vst.msk [vmem:[#allocation2] sm:$0xff] %vm350, %v335
        %352 = vst.msk [vmem:[#allocation2 + $0x8] sm:$0xff] %vm350, %v336
        %353 = vst.msk [vmem:[#allocation2 + $0x10] sm:$0xff] %vm350, %v337
        %354 = vst.msk [vmem:[#allocation2 + $0x18] sm:$0xff] %vm350, %v338
        %355 = vst.msk [vmem:[#allocation2 + $0x20] sm:$0xff] %vm350, %v339
        %356 = vst.msk [vmem:[#allocation2 + $0x28] sm:$0xff] %vm350, %v340
        %357 = vst.msk [vmem:[#allocation2 + $0x30] sm:$0xff] %vm350, %v341
        %358 = vst.msk [vmem:[#allocation2 + $0x38] sm:$0xff] %vm350, %v342
        %359 = vst.msk [vmem:[#allocation2 + $0x40] sm:$0xff] %vm350, %v343
        %360 = vst.msk [vmem:[#allocation2 + $0x48] sm:$0xff] %vm350, %v344
        %361 = vst.msk [vmem:[#allocation2 + $0x50] sm:$0xff] %vm350, %v345
        %362 = vst.msk [vmem:[#allocation2 + $0x58] sm:$0xff] %vm350, %v346
        %363 = vst.msk [vmem:[#allocation2 + $0x60] sm:$0xff] %vm350, %v347
        %364 = vst.msk [vmem:[#allocation2 + $0x68] sm:$0xff] %vm350, %v348
        %365 = vst.msk [vmem:[#allocation2 + $0x70] sm:$0xff] %vm350, %v349
        %v366 = vld [vmem:[%s320] sm:$0xff]
        %v367 = vld [vmem:[%s320 + $0x8] sm:$0xff]
        %v368 = vld [vmem:[%s320 + $0x10] sm:$0xff]
        %v369 = vld [vmem:[%s320 + $0x18] sm:$0xff]
        %v370 = vld [vmem:[%s320 + $0x20] sm:$0xff]
        %371 = vst.msk [vmem:[#allocation2 + $0x78] sm:$0xff] %vm350, %v366
        %372 = vst.msk [vmem:[#allocation2 + $0x80] sm:$0xff] %vm350, %v367
        %373 = vst.msk [vmem:[#allocation2 + $0x88] sm:$0xff] %vm350, %v368
        %374 = vst.msk [vmem:[#allocation2 + $0x90] sm:$0xff] %vm350, %v369
        %375 = vst.msk [vmem:[#allocation2 + $0x98] sm:$0xff] %vm350, %v370
        %v376 = vld [vmem:[#allocation2] sm:$0xff]
        %v377 = vld [vmem:[#allocation2 + $0x8] sm:$0xff]
        %v378 = vld [vmem:[#allocation2 + $0x10] sm:$0xff]
        %v379 = vld [vmem:[#allocation2 + $0x18] sm:$0xff]
        %v380 = vld [vmem:[#allocation2 + $0x20] sm:$0xff]
        %v381 = vld [vmem:[#allocation2 + $0x28] sm:$0xff]
        %v382 = vld [vmem:[#allocation2 + $0x30] sm:$0xff]
        %v383 = vld [vmem:[#allocation2 + $0x38] sm:$0xff]
        %v384 = vld [vmem:[#allocation2 + $0x40] sm:$0xff]
        %v385 = vld [vmem:[#allocation2 + $0x48] sm:$0xff]
        %v386 = vld [vmem:[#allocation2 + $0x50] sm:$0xff]
        %v387 = vld [vmem:[#allocation2 + $0x58] sm:$0xff]
        %v388 = vld [vmem:[#allocation2 + $0x60] sm:$0xff]
        %v389 = vld [vmem:[#allocation2 + $0x68] sm:$0xff]
        %v390 = vld [vmem:[#allocation2 + $0x70] sm:$0xff]
        %v391 = vld [vmem:[%s2] sm:$0xf]
        %v392 = vld [vmem:[#allocation2 + $0x1] sm:$0xff]
        %v393 = vld [vmem:[#allocation2 + $0x9] sm:$0xff]
        %v394 = vld [vmem:[#allocation2 + $0x11] sm:$0xff]
        %v395 = vld [vmem:[#allocation2 + $0x19] sm:$0xff]
        %v396 = vld [vmem:[#allocation2 + $0x21] sm:$0xff]
        %v397 = vld [vmem:[#allocation2 + $0x29] sm:$0xff]
        %v398 = vld [vmem:[#allocation2 + $0x31] sm:$0xff]
        %v399 = vld [vmem:[#allocation2 + $0x39] sm:$0xff]
        %v400 = vld [vmem:[#allocation2 + $0x41] sm:$0xff]
        %v401 = vld [vmem:[#allocation2 + $0x49] sm:$0xff]
        %v402 = vld [vmem:[#allocation2 + $0x51] sm:$0xff]
        %v403 = vld [vmem:[#allocation2 + $0x59] sm:$0xff]
        %v404 = vld [vmem:[#allocation2 + $0x61] sm:$0xff]
        %v405 = vld [vmem:[#allocation2 + $0x69] sm:$0xff]
        %v406 = vld [vmem:[#allocation2 + $0x71] sm:$0xff]
        %v407 = vld [vmem:[%s2 + $0x4] sm:$0xf]
        %v409 = vsel %vm350, %v392, 0
        %v412 = vsel %vm350, %v393, 0
        %v415 = vsel %vm350, %v394, 0
        %v418 = vsel %vm350, %v395, 0
        %v421 = vsel %vm350, %v396, 0
        %v424 = vsel %vm350, %v397, 0
        %v427 = vsel %vm350, %v398, 0
        %v430 = vsel %vm350, %v399, 0
        %v433 = vsel %vm350, %v400, 0
        %v436 = vsel %vm350, %v401, 0
        %v439 = vsel %vm350, %v402, 0
        %v442 = vsel %vm350, %v403, 0
        %v445 = vsel %vm350, %v404, 0
        %v448 = vsel %vm350, %v405, 0
        %v451 = vsel %vm350, %v406, 0
        %vm453 = vcmask 1043456
        %v455 = vsel %vm453, %v407, 0
        %457 = vmatprep.subr.mxu0 0.0
        %458 = vmatpush1.msra.mxu0 %v455
        %459 = vmatprep.subr.mxu0 0.0
        %460 = vmatpush1.msra.mxu0 0.0
        %461 = vmatprep.subr.mxu0 0.0
        %462 = vmatpush1.msra.mxu0 0.0
        %463 = vmatprep.subr.mxu0 0.0
        %464 = vmatpush1.msra.mxu0 0.0
        %465 = vmatprep.subr.mxu0 0.0
        %466 = vmatpush1.msra.mxu0 0.0
        %467 = vmatprep.subr.mxu0 0.0
        %468 = vmatpush1.msra.mxu0 0.0
        %469 = vmatprep.subr.mxu0 0.0
        %470 = vmatpush1.msra.mxu0 0.0
        %471 = vmatprep.subr.mxu0 0.0
        %472 = vmatpush1.msra.mxu0 0.0
        %473 = vmatprep.subr.mxu0 0.0
        %474 = vmatpush1.msra.mxu0 0.0
        %475 = vmatprep.subr.mxu0 0.0
        %476 = vmatpush1.msra.mxu0 0.0
        %477 = vmatprep.subr.mxu0 0.0
        %478 = vmatpush1.msra.mxu0 0.0
        %479 = vmatprep.subr.mxu0 0.0
        %480 = vmatpush1.msra.mxu0 0.0
        %481 = vmatprep.subr.mxu0 0.0
        %482 = vmatpush1.msra.mxu0 0.0
        %483 = vmatprep.subr.mxu0 0.0
        %484 = vmatpush1.msra.mxu0 0.0
        %485 = vmatprep.subr.mxu0 0.0
        %486 = vmatpush1.msra.mxu0 0.0
        %487 = vmatprep.subr.mxu0 0.0
        %488 = vmatpush1.msra.mxu0 0.0
        %489 = vmatprep.subr.mxu0 0.0
        %490 = vmatpush1.msra.mxu0 0.0
        %491 = vmatprep.subr.mxu0 0.0
        %492 = vmatpush1.msra.mxu0 0.0
        %493 = vmatprep.subr.mxu0 0.0
        %494 = vmatpush1.msra.mxu0 0.0
        %495 = vmatprep.subr.mxu0 0.0
        %496 = vmatpush1.msra.mxu0 0.0
        %497 = vmatprep.subr.mxu0 0.0
        %498 = vmatpush1.msra.mxu0 0.0
        %499 = vmatprep.subr.mxu0 0.0
        %500 = vmatpush1.msra.mxu0 0.0
        %501 = vmatprep.subr.mxu0 0.0
        %502 = vmatpush1.msra.mxu0 0.0
        %503 = vmatprep.subr.mxu0 0.0
        %504 = vmatpush1.msra.mxu0 0.0
        %505 = vmatprep.subr.mxu0 0.0
        %506 = vmatpush1.msra.mxu0 0.0
        %507 = vmatprep.subr.mxu0 0.0
        %508 = vmatpush1.msra.mxu0 0.0
        %509 = vmatprep.subr.mxu0 0.0
        %510 = vmatpush1.msra.mxu0 0.0
        %511 = vmatprep.subr.mxu0 0.0
        %512 = vmatpush1.msra.mxu0 0.0
        %513 = vmatprep.subr.mxu0 0.0
        %514 = vmatpush1.msra.mxu0 0.0
        %515 = vmatprep.subr.mxu0 0.0
        %516 = vmatpush1.msra.mxu0 0.0
        %517 = vmatprep.subr.mxu0 0.0
        %518 = vmatpush1.msra.mxu0 0.0
        %519 = vmatprep.subr.mxu0 0.0
        %520 = vmatpush1.msra.mxu0 0.0
        %521 = vmatprep.mubr.f32.mxu0 0.0
        %522 = vmatmul.mubr.f32.gmra.mrb[0].mxu0 %v409
        %v523 = vpop.f32.mrb[0].mxu0
        %v524 = vadd.f32 0.0, %v523
        %v525 = vpop.f32.mrb[0].mxu0
        %526 = vmatprep.mubr.f32.mxu0 0.0
        %527 = vmatmul.mubr.f32.gmra.mrb[0].mxu0 %v412
        %v528 = vpop.f32.mrb[0].mxu0
        %v529 = vadd.f32 0.0, %v528
        %v530 = vpop.f32.mrb[0].mxu0
        %531 = vmatprep.mubr.f32.mxu0 0.0
        %532 = vmatmul.mubr.f32.gmra.mrb[0].mxu0 %v415
        %v533 = vpop.f32.mrb[0].mxu0
        %v534 = vadd.f32 0.0, %v533
        %v535 = vpop.f32.mrb[0].mxu0
        %536 = vmatprep.mubr.f32.mxu0 0.0
        %537 = vmatmul.mubr.f32.gmra.mrb[0].mxu0 %v418
        %v538 = vpop.f32.mrb[0].mxu0
        %v539 = vadd.f32 0.0, %v538
        %v540 = vpop.f32.mrb[0].mxu0
        %541 = vmatprep.mubr.f32.mxu0 0.0
        %542 = vmatmul.mubr.f32.gmra.mrb[0].mxu0 %v421
        %v543 = vpop.f32.mrb[0].mxu0
        %v544 = vadd.f32 0.0, %v543
        %v545 = vpop.f32.mrb[0].mxu0
        %546 = vmatprep.mubr.f32.mxu0 0.0
        %547 = vmatmul.mubr.f32.gmra.mrb[0].mxu0 %v424
        %v548 = vpop.f32.mrb[0].mxu0
        %v549 = vadd.f32 0.0, %v548
        %v550 = vpop.f32.mrb[0].mxu0
        %551 = vmatprep.mubr.f32.mxu0 0.0
        %552 = vmatmul.mubr.f32.gmra.mrb[0].mxu0 %v427
        %v553 = vpop.f32.mrb[0].mxu0
        %v554 = vadd.f32 0.0, %v553
        %v555 = vpop.f32.mrb[0].mxu0
        %556 = vmatprep.mubr.f32.mxu0 0.0
        %557 = vmatmul.mubr.f32.gmra.mrb[0].mxu0 %v430
        %v558 = vpop.f32.mrb[0].mxu0
        %v559 = vadd.f32 0.0, %v558
        %v560 = vpop.f32.mrb[0].mxu0
        %561 = vmatprep.mubr.f32.mxu0 0.0
        %562 = vmatmul.mubr.f32.gmra.mrb[0].mxu0 %v433
        %v563 = vpop.f32.mrb[0].mxu0
        %v564 = vadd.f32 0.0, %v563
        %v565 = vpop.f32.mrb[0].mxu0
        %566 = vmatprep.mubr.f32.mxu0 0.0
        %567 = vmatmul.mubr.f32.gmra.mrb[0].mxu0 %v436
        %v568 = vpop.f32.mrb[0].mxu0
        %v569 = vadd.f32 0.0, %v568
        %v570 = vpop.f32.mrb[0].mxu0
        %571 = vmatprep.mubr.f32.mxu0 0.0
        %572 = vmatmul.mubr.f32.gmra.mrb[0].mxu0 %v439
        %v573 = vpop.f32.mrb[0].mxu0
        %v574 = vadd.f32 0.0, %v573
        %v575 = vpop.f32.mrb[0].mxu0
        %576 = vmatprep.mubr.f32.mxu0 0.0
        %577 = vmatmul.mubr.f32.gmra.mrb[0].mxu0 %v442
        %v578 = vpop.f32.mrb[0].mxu0
        %v579 = vadd.f32 0.0, %v578
        %v580 = vpop.f32.mrb[0].mxu0
        %581 = vmatprep.mubr.f32.mxu0 0.0
        %582 = vmatmul.mubr.f32.gmra.mrb[0].mxu0 %v445
        %v583 = vpop.f32.mrb[0].mxu0
        %v584 = vadd.f32 0.0, %v583
        %v585 = vpop.f32.mrb[0].mxu0
        %586 = vmatprep.mubr.f32.mxu0 0.0
        %587 = vmatmul.mubr.f32.gmra.mrb[0].mxu0 %v448
        %v588 = vpop.f32.mrb[0].mxu0
        %v589 = vadd.f32 0.0, %v588
        %v590 = vpop.f32.mrb[0].mxu0
        %591 = vmatprep.mubr.f32.mxu0 0.0
        %592 = vmatmul.mubr.f32.gmra.mrb[0].mxu0 %v451
        %v593 = vpop.f32.mrb[0].mxu0
        %v594 = vadd.f32 0.0, %v593
        %v595 = vpop.f32.mrb[0].mxu0
        %596 = vdwg.mxu0
        %v598 = vsel %vm350, %v376, 0
        %v601 = vsel %vm350, %v377, 0
        %v604 = vsel %vm350, %v378, 0
        %v607 = vsel %vm350, %v379, 0
        %v610 = vsel %vm350, %v380, 0
        %v613 = vsel %vm350, %v381, 0
        %v616 = vsel %vm350, %v382, 0
        %v619 = vsel %vm350, %v383, 0
        %v622 = vsel %vm350, %v384, 0
        %v625 = vsel %vm350, %v385, 0
        %v628 = vsel %vm350, %v386, 0
        %v631 = vsel %vm350, %v387, 0
        %v634 = vsel %vm350, %v388, 0
        %v637 = vsel %vm350, %v389, 0
        %v640 = vsel %vm350, %v390, 0
        %v643 = vsel %vm453, %v391, 0
        %645 = vmatprep.subr.mxu0 0.0
        %646 = vmatpush1.msra.mxu0 %v643
        %647 = vmatprep.subr.mxu0 0.0
        %648 = vmatpush1.msra.mxu0 0.0
        %649 = vmatprep.subr.mxu0 0.0
        %650 = vmatpush1.msra.mxu0 0.0
        %651 = vmatprep.subr.mxu0 0.0
        %652 = vmatpush1.msra.mxu0 0.0
        %653 = vmatprep.subr.mxu0 0.0
        %654 = vmatpush1.msra.mxu0 0.0
        %655 = vmatprep.subr.mxu0 0.0
        %656 = vmatpush1.msra.mxu0 0.0
        %657 = vmatprep.subr.mxu0 0.0
        %658 = vmatpush1.msra.mxu0 0.0
        %659 = vmatprep.subr.mxu0 0.0
        %660 = vmatpush1.msra.mxu0 0.0
        %661 = vmatprep.subr.mxu0 0.0
        %662 = vmatpush1.msra.mxu0 0.0
        %663 = vmatprep.subr.mxu0 0.0
        %664 = vmatpush1.msra.mxu0 0.0
        %665 = vmatprep.subr.mxu0 0.0
        %666 = vmatpush1.msra.mxu0 0.0
        %667 = vmatprep.subr.mxu0 0.0
        %668 = vmatpush1.msra.mxu0 0.0
        %669 = vmatprep.subr.mxu0 0.0
        %670 = vmatpush1.msra.mxu0 0.0
        %671 = vmatprep.subr.mxu0 0.0
        %672 = vmatpush1.msra.mxu0 0.0
        %673 = vmatprep.subr.mxu0 0.0
        %674 = vmatpush1.msra.mxu0 0.0
        %675 = vmatprep.subr.mxu0 0.0
        %676 = vmatpush1.msra.mxu0 0.0
        %677 = vmatprep.subr.mxu0 0.0
        %678 = vmatpush1.msra.mxu0 0.0
        %679 = vmatprep.subr.mxu0 0.0
        %680 = vmatpush1.msra.mxu0 0.0
        %681 = vmatprep.subr.mxu0 0.0
        %682 = vmatpush1.msra.mxu0 0.0
        %683 = vmatprep.subr.mxu0 0.0
        %684 = vmatpush1.msra.mxu0 0.0
        %685 = vmatprep.subr.mxu0 0.0
        %686 = vmatpush1.msra.mxu0 0.0
        %687 = vmatprep.subr.mxu0 0.0
        %688 = vmatpush1.msra.mxu0 0.0
        %689 = vmatprep.subr.mxu0 0.0
        %690 = vmatpush1.msra.mxu0 0.0
        %691 = vmatprep.subr.mxu0 0.0
        %692 = vmatpush1.msra.mxu0 0.0
        %693 = vmatprep.subr.mxu0 0.0
        %694 = vmatpush1.msra.mxu0 0.0
        %695 = vmatprep.subr.mxu0 0.0
        %696 = vmatpush1.msra.mxu0 0.0
        %697 = vmatprep.subr.mxu0 0.0
        %698 = vmatpush1.msra.mxu0 0.0
        %699 = vmatprep.subr.mxu0 0.0
        %700 = vmatpush1.msra.mxu0 0.0
        %701 = vmatprep.subr.mxu0 0.0
        %702 = vmatpush1.msra.mxu0 0.0
        %703 = vmatprep.subr.mxu0 0.0
        %704 = vmatpush1.msra.mxu0 0.0
        %705 = vmatprep.subr.mxu0 0.0
        %706 = vmatpush1.msra.mxu0 0.0
        %707 = vmatprep.subr.mxu0 0.0
        %708 = vmatpush1.msra.mxu0 0.0
        %709 = vmatprep.mubr.f32.mxu0 0.0
        %710 = vmatmul.mubr.f32.gmra.mrb[0].mxu0 %v598
        %v711 = vpop.f32.mrb[0].mxu0
        %v712 = vadd.f32 %v524, %v711
        %v713 = vpop.f32.mrb[0].mxu0
        %714 = vmatprep.mubr.f32.mxu0 0.0
        %715 = vmatmul.mubr.f32.gmra.mrb[0].mxu0 %v601
        %v716 = vpop.f32.mrb[0].mxu0
        %v717 = vadd.f32 %v529, %v716
        %v718 = vpop.f32.mrb[0].mxu0
        %719 = vmatprep.mubr.f32.mxu0 0.0
        %720 = vmatmul.mubr.f32.gmra.mrb[0].mxu0 %v604
        %v721 = vpop.f32.mrb[0].mxu0
        %v722 = vadd.f32 %v534, %v721
        %v723 = vpop.f32.mrb[0].mxu0
        %724 = vmatprep.mubr.f32.mxu0 0.0
        %725 = vmatmul.mubr.f32.gmra.mrb[0].mxu0 %v607
        %v726 = vpop.f32.mrb[0].mxu0
        %v727 = vadd.f32 %v539, %v726
        %v728 = vpop.f32.mrb[0].mxu0
        %729 = vmatprep.mubr.f32.mxu0 0.0
        %730 = vmatmul.mubr.f32.gmra.mrb[0].mxu0 %v610
        %v731 = vpop.f32.mrb[0].mxu0
        %v732 = vadd.f32 %v544, %v731
        %v733 = vpop.f32.mrb[0].mxu0
        %734 = vmatprep.mubr.f32.mxu0 0.0
        %735 = vmatmul.mubr.f32.gmra.mrb[0].mxu0 %v613
        %v736 = vpop.f32.mrb[0].mxu0
        %v737 = vadd.f32 %v549, %v736
        %v738 = vpop.f32.mrb[0].mxu0
        %739 = vmatprep.mubr.f32.mxu0 0.0
        %740 = vmatmul.mubr.f32.gmra.mrb[0].mxu0 %v616
        %v741 = vpop.f32.mrb[0].mxu0
        %v742 = vadd.f32 %v554, %v741
        %v743 = vpop.f32.mrb[0].mxu0
        %744 = vmatprep.mubr.f32.mxu0 0.0
        %745 = vmatmul.mubr.f32.gmra.mrb[0].mxu0 %v619
        %v746 = vpop.f32.mrb[0].mxu0
        %v747 = vadd.f32 %v559, %v746
        %v748 = vpop.f32.mrb[0].mxu0
        %749 = vmatprep.mubr.f32.mxu0 0.0
        %750 = vmatmul.mubr.f32.gmra.mrb[0].mxu0 %v622
        %v751 = vpop.f32.mrb[0].mxu0
        %v752 = vadd.f32 %v564, %v751
        %v753 = vpop.f32.mrb[0].mxu0
        %754 = vmatprep.mubr.f32.mxu0 0.0
        %755 = vmatmul.mubr.f32.gmra.mrb[0].mxu0 %v625
        %v756 = vpop.f32.mrb[0].mxu0
        %v757 = vadd.f32 %v569, %v756
        %v758 = vpop.f32.mrb[0].mxu0
        %759 = vmatprep.mubr.f32.mxu0 0.0
        %760 = vmatmul.mubr.f32.gmra.mrb[0].mxu0 %v628
        %v761 = vpop.f32.mrb[0].mxu0
        %v762 = vadd.f32 %v574, %v761
        %v763 = vpop.f32.mrb[0].mxu0
        %764 = vmatprep.mubr.f32.mxu0 0.0
        %765 = vmatmul.mubr.f32.gmra.mrb[0].mxu0 %v631
        %v766 = vpop.f32.mrb[0].mxu0
        %v767 = vadd.f32 %v579, %v766
        %v768 = vpop.f32.mrb[0].mxu0
        %769 = vmatprep.mubr.f32.mxu0 0.0
        %770 = vmatmul.mubr.f32.gmra.mrb[0].mxu0 %v634
        %v771 = vpop.f32.mrb[0].mxu0
        %v772 = vadd.f32 %v584, %v771
        %v773 = vpop.f32.mrb[0].mxu0
        %774 = vmatprep.mubr.f32.mxu0 0.0
        %775 = vmatmul.mubr.f32.gmra.mrb[0].mxu0 %v637
        %v776 = vpop.f32.mrb[0].mxu0
        %v777 = vadd.f32 %v589, %v776
        %v778 = vpop.f32.mrb[0].mxu0
        %779 = vmatprep.mubr.f32.mxu0 0.0
        %780 = vmatmul.mubr.f32.gmra.mrb[0].mxu0 %v640
        %v781 = vpop.f32.mrb[0].mxu0
        %v782 = vadd.f32 %v594, %v781
        %v783 = vpop.f32.mrb[0].mxu0
        %784 = vdwg.mxu0
        %v785 = vld [vmem:[#allocation2 + $0x2] sm:$0xff]
        %v786 = vld [vmem:[#allocation2 + $0xa] sm:$0xff]
        %v787 = vld [vmem:[#allocation2 + $0x12] sm:$0xff]
        %v788 = vld [vmem:[#allocation2 + $0x1a] sm:$0xff]
        %v789 = vld [vmem:[#allocation2 + $0x22] sm:$0xff]
        %v790 = vld [vmem:[#allocation2 + $0x2a] sm:$0xff]
        %v791 = vld [vmem:[#allocation2 + $0x32] sm:$0xff]
        %v792 = vld [vmem:[#allocation2 + $0x3a] sm:$0xff]
        %v793 = vld [vmem:[#allocation2 + $0x42] sm:$0xff]
        %v794 = vld [vmem:[#allocation2 + $0x4a] sm:$0xff]
        %v795 = vld [vmem:[#allocation2 + $0x52] sm:$0xff]
        %v796 = vld [vmem:[#allocation2 + $0x5a] sm:$0xff]
        %v797 = vld [vmem:[#allocation2 + $0x62] sm:$0xff]
        %v798 = vld [vmem:[#allocation2 + $0x6a] sm:$0xff]
        %v799 = vld [vmem:[#allocation2 + $0x72] sm:$0xff]
        %v800 = vld [vmem:[%s2 + $0x8] sm:$0xf]
        %v802 = vsel %vm350, %v785, 0
        %v805 = vsel %vm350, %v786, 0
        %v808 = vsel %vm350, %v787, 0
        %v811 = vsel %vm350, %v788, 0
        %v814 = vsel %vm350, %v789, 0
        %v817 = vsel %vm350, %v790, 0
        %v820 = vsel %vm350, %v791, 0
        %v823 = vsel %vm350, %v792, 0
        %v826 = vsel %vm350, %v793, 0
        %v829 = vsel %vm350, %v794, 0
        %v832 = vsel %vm350, %v795, 0
        %v835 = vsel %vm350, %v796, 0
        %v838 = vsel %vm350, %v797, 0
        %v841 = vsel %vm350, %v798, 0
        %v844 = vsel %vm350, %v799, 0
        %v847 = vsel %vm453, %v800, 0
        %849 = vmatprep.subr.mxu0 0.0
        %850 = vmatpush1.msra.mxu0 %v847
        %851 = vmatprep.subr.mxu0 0.0
        %852 = vmatpush1.msra.mxu0 0.0
        %853 = vmatprep.subr.mxu0 0.0
        %854 = vmatpush1.msra.mxu0 0.0
        %855 = vmatprep.subr.mxu0 0.0
        %856 = vmatpush1.msra.mxu0 0.0
        %857 = vmatprep.subr.mxu0 0.0
        %858 = vmatpush1.msra.mxu0 0.0
        %859 = vmatprep.subr.mxu0 0.0
        %860 = vmatpush1.msra.mxu0 0.0
        %861 = vmatprep.subr.mxu0 0.0
        %862 = vmatpush1.msra.mxu0 0.0
        %863 = vmatprep.subr.mxu0 0.0
        %864 = vmatpush1.msra.mxu0 0.0
        %865 = vmatprep.subr.mxu0 0.0
        %866 = vmatpush1.msra.mxu0 0.0
        %867 = vmatprep.subr.mxu0 0.0
        %868 = vmatpush1.msra.mxu0 0.0
        %869 = vmatprep.subr.mxu0 0.0
        %870 = vmatpush1.msra.mxu0 0.0
        %871 = vmatprep.subr.mxu0 0.0
        %872 = vmatpush1.msra.mxu0 0.0
        %873 = vmatprep.subr.mxu0 0.0
        %874 = vmatpush1.msra.mxu0 0.0
        %875 = vmatprep.subr.mxu0 0.0
        %876 = vmatpush1.msra.mxu0 0.0
        %877 = vmatprep.subr.mxu0 0.0
        %878 = vmatpush1.msra.mxu0 0.0
        %879 = vmatprep.subr.mxu0 0.0
        %880 = vmatpush1.msra.mxu0 0.0
        %881 = vmatprep.subr.mxu0 0.0
        %882 = vmatpush1.msra.mxu0 0.0
        %883 = vmatprep.subr.mxu0 0.0
        %884 = vmatpush1.msra.mxu0 0.0
        %885 = vmatprep.subr.mxu0 0.0
        %886 = vmatpush1.msra.mxu0 0.0
        %887 = vmatprep.subr.mxu0 0.0
        %888 = vmatpush1.msra.mxu0 0.0
        %889 = vmatprep.subr.mxu0 0.0
        %890 = vmatpush1.msra.mxu0 0.0
        %891 = vmatprep.subr.mxu0 0.0
        %892 = vmatpush1.msra.mxu0 0.0
        %893 = vmatprep.subr.mxu0 0.0
        %894 = vmatpush1.msra.mxu0 0.0
        %895 = vmatprep.subr.mxu0 0.0
        %896 = vmatpush1.msra.mxu0 0.0
        %897 = vmatprep.subr.mxu0 0.0
        %898 = vmatpush1.msra.mxu0 0.0
        %899 = vmatprep.subr.mxu0 0.0
        %900 = vmatpush1.msra.mxu0 0.0
        %901 = vmatprep.subr.mxu0 0.0
        %902 = vmatpush1.msra.mxu0 0.0
        %903 = vmatprep.subr.mxu0 0.0
        %904 = vmatpush1.msra.mxu0 0.0
        %905 = vmatprep.subr.mxu0 0.0
        %906 = vmatpush1.msra.mxu0 0.0
        %907 = vmatprep.subr.mxu0 0.0
        %908 = vmatpush1.msra.mxu0 0.0
        %909 = vmatprep.subr.mxu0 0.0
        %910 = vmatpush1.msra.mxu0 0.0
        %911 = vmatprep.subr.mxu0 0.0
        %912 = vmatpush1.msra.mxu0 0.0
        %913 = vmatprep.mubr.f32.mxu0 0.0
        %914 = vmatmul.mubr.f32.gmra.mrb[0].mxu0 %v802
        %v915 = vpop.f32.mrb[0].mxu0
        %v916 = vadd.f32 0.0, %v915
        %v917 = vpop.f32.mrb[0].mxu0
        %918 = vmatprep.mubr.f32.mxu0 0.0
        %919 = vmatmul.mubr.f32.gmra.mrb[0].mxu0 %v805
        %v920 = vpop.f32.mrb[0].mxu0
        %v921 = vadd.f32 0.0, %v920
        %v922 = vpop.f32.mrb[0].mxu0
        %923 = vmatprep.mubr.f32.mxu0 0.0
        %924 = vmatmul.mubr.f32.gmra.mrb[0].mxu0 %v808
        %v925 = vpop.f32.mrb[0].mxu0
        %v926 = vadd.f32 0.0, %v925
        %v927 = vpop.f32.mrb[0].mxu0
        %928 = vmatprep.mubr.f32.mxu0 0.0
        %929 = vmatmul.mubr.f32.gmra.mrb[0].mxu0 %v811
        %v930 = vpop.f32.mrb[0].mxu0
        %v931 = vadd.f32 0.0, %v930
        %v932 = vpop.f32.mrb[0].mxu0
        %933 = vmatprep.mubr.f32.mxu0 0.0
        %934 = vmatmul.mubr.f32.gmra.mrb[0].mxu0 %v814
        %v935 = vpop.f32.mrb[0].mxu0
        %v936 = vadd.f32 0.0, %v935
        %v937 = vpop.f32.mrb[0].mxu0
        %938 = vmatprep.mubr.f32.mxu0 0.0
        %939 = vmatmul.mubr.f32.gmra.mrb[0].mxu0 %v817
        %v940 = vpop.f32.mrb[0].mxu0
        %v941 = vadd.f32 0.0, %v940
        %v942 = vpop.f32.mrb[0].mxu0
        %943 = vmatprep.mubr.f32.mxu0 0.0
        %944 = vmatmul.mubr.f32.gmra.mrb[0].mxu0 %v820
        %v945 = vpop.f32.mrb[0].mxu0
        %v946 = vadd.f32 0.0, %v945
        %v947 = vpop.f32.mrb[0].mxu0
        %948 = vmatprep.mubr.f32.mxu0 0.0
        %949 = vmatmul.mubr.f32.gmra.mrb[0].mxu0 %v823
        %v950 = vpop.f32.mrb[0].mxu0
        %v951 = vadd.f32 0.0, %v950
        %v952 = vpop.f32.mrb[0].mxu0
        %953 = vmatprep.mubr.f32.mxu0 0.0
        %954 = vmatmul.mubr.f32.gmra.mrb[0].mxu0 %v826
        %v955 = vpop.f32.mrb[0].mxu0
        %v956 = vadd.f32 0.0, %v955
        %v957 = vpop.f32.mrb[0].mxu0
        %958 = vmatprep.mubr.f32.mxu0 0.0
        %959 = vmatmul.mubr.f32.gmra.mrb[0].mxu0 %v829
        %v960 = vpop.f32.mrb[0].mxu0
        %v961 = vadd.f32 0.0, %v960
        %v962 = vpop.f32.mrb[0].mxu0
        %963 = vmatprep.mubr.f32.mxu0 0.0
        %964 = vmatmul.mubr.f32.gmra.mrb[0].mxu0 %v832
        %v965 = vpop.f32.mrb[0].mxu0
        %v966 = vadd.f32 0.0, %v965
        %v967 = vpop.f32.mrb[0].mxu0
        %968 = vmatprep.mubr.f32.mxu0 0.0
        %969 = vmatmul.mubr.f32.gmra.mrb[0].mxu0 %v835
        %v970 = vpop.f32.mrb[0].mxu0
        %v971 = vadd.f32 0.0, %v970
        %v972 = vpop.f32.mrb[0].mxu0
        %973 = vmatprep.mubr.f32.mxu0 0.0
        %974 = vmatmul.mubr.f32.gmra.mrb[0].mxu0 %v838
        %v975 = vpop.f32.mrb[0].mxu0
        %v976 = vadd.f32 0.0, %v975
        %v977 = vpop.f32.mrb[0].mxu0
        %978 = vmatprep.mubr.f32.mxu0 0.0
        %979 = vmatmul.mubr.f32.gmra.mrb[0].mxu0 %v841
        %v980 = vpop.f32.mrb[0].mxu0
        %v981 = vadd.f32 0.0, %v980
        %v982 = vpop.f32.mrb[0].mxu0
        %983 = vmatprep.mubr.f32.mxu0 0.0
        %984 = vmatmul.mubr.f32.gmra.mrb[0].mxu0 %v844
        %v985 = vpop.f32.mrb[0].mxu0
        %v986 = vadd.f32 0.0, %v985
        %v987 = vpop.f32.mrb[0].mxu0
        %988 = vdwg.mxu0
        %v989 = vadd.f32 %v712, %v916
        %v990 = vadd.f32 %v717, %v921
        %v991 = vadd.f32 %v722, %v926
        %v992 = vadd.f32 %v727, %v931
        %v993 = vadd.f32 %v732, %v936
        %v994 = vadd.f32 %v737, %v941
        %v995 = vadd.f32 %v742, %v946
        %v996 = vadd.f32 %v747, %v951
        %v997 = vadd.f32 %v752, %v956
        %v998 = vadd.f32 %v757, %v961
        %v999 = vadd.f32 %v762, %v966
        %v1000 = vadd.f32 %v767, %v971
        %v1001 = vadd.f32 %v772, %v976
        %v1002 = vadd.f32 %v777, %v981
        %v1003 = vadd.f32 %v782, %v986
        %v1004 = vld [vmem:[#allocation2 + $0x10] sm:$0xff]
        %v1005 = vld [vmem:[#allocation2 + $0x18] sm:$0xff]
        %v1006 = vld [vmem:[#allocation2 + $0x20] sm:$0xff]
        %v1007 = vld [vmem:[#allocation2 + $0x28] sm:$0xff]
        %v1008 = vld [vmem:[#allocation2 + $0x30] sm:$0xff]
        %v1009 = vld [vmem:[#allocation2 + $0x38] sm:$0xff]
        %v1010 = vld [vmem:[#allocation2 + $0x40] sm:$0xff]
        %v1011 = vld [vmem:[#allocation2 + $0x48] sm:$0xff]
        %v1012 = vld [vmem:[#allocation2 + $0x50] sm:$0xff]
        %v1013 = vld [vmem:[#allocation2 + $0x58] sm:$0xff]
        %v1014 = vld [vmem:[#allocation2 + $0x60] sm:$0xff]
        %v1015 = vld [vmem:[#allocation2 + $0x68] sm:$0xff]
        %v1016 = vld [vmem:[#allocation2 + $0x70] sm:$0xff]
        %v1017 = vld [vmem:[#allocation2 + $0x78] sm:$0xff]
        %v1018 = vld [vmem:[#allocation2 + $0x80] sm:$0xff]
        %v1019 = vld [vmem:[%s2 + $0xc] sm:$0xf]
        %v1021 = vsel %vm350, %v1004, 0
        %v1024 = vsel %vm350, %v1005, 0
        %v1027 = vsel %vm350, %v1006, 0
        %v1030 = vsel %vm350, %v1007, 0
        %v1033 = vsel %vm350, %v1008, 0
        %v1036 = vsel %vm350, %v1009, 0
        %v1039 = vsel %vm350, %v1010, 0
        %v1042 = vsel %vm350, %v1011, 0
        %v1045 = vsel %vm350, %v1012, 0
        %v1048 = vsel %vm350, %v1013, 0
        %v1051 = vsel %vm350, %v1014, 0
        %v1054 = vsel %vm350, %v1015, 0
        %v1057 = vsel %vm350, %v1016, 0
        %v1060 = vsel %vm350, %v1017, 0
        %v1063 = vsel %vm350, %v1018, 0
        %v1066 = vsel %vm453, %v1019, 0
        %1068 = vmatprep.subr.mxu0 0.0
        %1069 = vmatpush1.msra.mxu0 %v1066
        %1070 = vmatprep.subr.mxu0 0.0
        %1071 = vmatpush1.msra.mxu0 0.0
        %1072 = vmatprep.subr.mxu0 0.0
        %1073 = vmatpush1.msra.mxu0 0.0
        %1074 = vmatprep.subr.mxu0 0.0
        %1075 = vmatpush1.msra.mxu0 0.0
        %1076 = vmatprep.subr.mxu0 0.0
        %1077 = vmatpush1.msra.mxu0 0.0
        %1078 = vmatprep.subr.mxu0 0.0
        %1079 = vmatpush1.msra.mxu0 0.0
        %1080 = vmatprep.subr.mxu0 0.0
        %1081 = vmatpush1.msra.mxu0 0.0
        %1082 = vmatprep.subr.mxu0 0.0
        %1083 = vmatpush1.msra.mxu0 0.0
        %1084 = vmatprep.subr.mxu0 0.0
        %1085 = vmatpush1.msra.mxu0 0.0
        %1086 = vmatprep.subr.mxu0 0.0
        %1087 = vmatpush1.msra.mxu0 0.0
        %1088 = vmatprep.subr.mxu0 0.0
        %1089 = vmatpush1.msra.mxu0 0.0
        %1090 = vmatprep.subr.mxu0 0.0
        %1091 = vmatpush1.msra.mxu0 0.0
        %1092 = vmatprep.subr.mxu0 0.0
        %1093 = vmatpush1.msra.mxu0 0.0
        %1094 = vmatprep.subr.mxu0 0.0
        %1095 = vmatpush1.msra.mxu0 0.0
        %1096 = vmatprep.subr.mxu0 0.0
        %1097 = vmatpush1.msra.mxu0 0.0
        %1098 = vmatprep.subr.mxu0 0.0
        %1099 = vmatpush1.msra.mxu0 0.0
        %1100 = vmatprep.subr.mxu0 0.0
        %1101 = vmatpush1.msra.mxu0 0.0
        %1102 = vmatprep.subr.mxu0 0.0
        %1103 = vmatpush1.msra.mxu0 0.0
        %1104 = vmatprep.subr.mxu0 0.0
        %1105 = vmatpush1.msra.mxu0 0.0
        %1106 = vmatprep.subr.mxu0 0.0
        %1107 = vmatpush1.msra.mxu0 0.0
        %1108 = vmatprep.subr.mxu0 0.0
        %1109 = vmatpush1.msra.mxu0 0.0
        %1110 = vmatprep.subr.mxu0 0.0
        %1111 = vmatpush1.msra.mxu0 0.0
        %1112 = vmatprep.subr.mxu0 0.0
        %1113 = vmatpush1.msra.mxu0 0.0
        %1114 = vmatprep.subr.mxu0 0.0
        %1115 = vmatpush1.msra.mxu0 0.0
        %1116 = vmatprep.subr.mxu0 0.0
        %1117 = vmatpush1.msra.mxu0 0.0
        %1118 = vmatprep.subr.mxu0 0.0
        %1119 = vmatpush1.msra.mxu0 0.0
        %1120 = vmatprep.subr.mxu0 0.0
        %1121 = vmatpush1.msra.mxu0 0.0
        %1122 = vmatprep.subr.mxu0 0.0
        %1123 = vmatpush1.msra.mxu0 0.0
        %1124 = vmatprep.subr.mxu0 0.0
        %1125 = vmatpush1.msra.mxu0 0.0
        %1126 = vmatprep.subr.mxu0 0.0
        %1127 = vmatpush1.msra.mxu0 0.0
        %1128 = vmatprep.subr.mxu0 0.0
        %1129 = vmatpush1.msra.mxu0 0.0
        %1130 = vmatprep.subr.mxu0 0.0
        %1131 = vmatpush1.msra.mxu0 0.0
        %1132 = vmatprep.mubr.f32.mxu0 0.0
        %1133 = vmatmul.mubr.f32.gmra.mrb[0].mxu0 %v1021
        %v1134 = vpop.f32.mrb[0].mxu0
        %v1135 = vadd.f32 0.0, %v1134
        %v1136 = vpop.f32.mrb[0].mxu0
        %1137 = vmatprep.mubr.f32.mxu0 0.0
        %1138 = vmatmul.mubr.f32.gmra.mrb[0].mxu0 %v1024
        %v1139 = vpop.f32.mrb[0].mxu0
        %v1140 = vadd.f32 0.0, %v1139
        %v1141 = vpop.f32.mrb[0].mxu0
        %1142 = vmatprep.mubr.f32.mxu0 0.0
        %1143 = vmatmul.mubr.f32.gmra.mrb[0].mxu0 %v1027
        %v1144 = vpop.f32.mrb[0].mxu0
        %v1145 = vadd.f32 0.0, %v1144
        %v1146 = vpop.f32.mrb[0].mxu0
        %1147 = vmatprep.mubr.f32.mxu0 0.0
        %1148 = vmatmul.mubr.f32.gmra.mrb[0].mxu0 %v1030
        %v1149 = vpop.f32.mrb[0].mxu0
        %v1150 = vadd.f32 0.0, %v1149
        %v1151 = vpop.f32.mrb[0].mxu0
        %1152 = vmatprep.mubr.f32.mxu0 0.0
        %1153 = vmatmul.mubr.f32.gmra.mrb[0].mxu0 %v1033
        %v1154 = vpop.f32.mrb[0].mxu0
        %v1155 = vadd.f32 0.0, %v1154
        %v1156 = vpop.f32.mrb[0].mxu0
        %1157 = vmatprep.mubr.f32.mxu0 0.0
        %1158 = vmatmul.mubr.f32.gmra.mrb[0].mxu0 %v1036
        %v1159 = vpop.f32.mrb[0].mxu0
        %v1160 = vadd.f32 0.0, %v1159
        %v1161 = vpop.f32.mrb[0].mxu0
        %1162 = vmatprep.mubr.f32.mxu0 0.0
        %1163 = vmatmul.mubr.f32.gmra.mrb[0].mxu0 %v1039
        %v1164 = vpop.f32.mrb[0].mxu0
        %v1165 = vadd.f32 0.0, %v1164
        %v1166 = vpop.f32.mrb[0].mxu0
        %1167 = vmatprep.mubr.f32.mxu0 0.0
        %1168 = vmatmul.mubr.f32.gmra.mrb[0].mxu0 %v1042
        %v1169 = vpop.f32.mrb[0].mxu0
        %v1170 = vadd.f32 0.0, %v1169
        %v1171 = vpop.f32.mrb[0].mxu0
        %1172 = vmatprep.mubr.f32.mxu0 0.0
        %1173 = vmatmul.mubr.f32.gmra.mrb[0].mxu0 %v1045
        %v1174 = vpop.f32.mrb[0].mxu0
        %v1175 = vadd.f32 0.0, %v1174
        %v1176 = vpop.f32.mrb[0].mxu0
        %1177 = vmatprep.mubr.f32.mxu0 0.0
        %1178 = vmatmul.mubr.f32.gmra.mrb[0].mxu0 %v1048
        %v1179 = vpop.f32.mrb[0].mxu0
        %v1180 = vadd.f32 0.0, %v1179
        %v1181 = vpop.f32.mrb[0].mxu0
        %1182 = vmatprep.mubr.f32.mxu0 0.0
        %1183 = vmatmul.mubr.f32.gmra.mrb[0].mxu0 %v1051
        %v1184 = vpop.f32.mrb[0].mxu0
        %v1185 = vadd.f32 0.0, %v1184
        %v1186 = vpop.f32.mrb[0].mxu0
        %1187 = vmatprep.mubr.f32.mxu0 0.0
        %1188 = vmatmul.mubr.f32.gmra.mrb[0].mxu0 %v1054
        %v1189 = vpop.f32.mrb[0].mxu0
        %v1190 = vadd.f32 0.0, %v1189
        %v1191 = vpop.f32.mrb[0].mxu0
        %1192 = vmatprep.mubr.f32.mxu0 0.0
        %1193 = vmatmul.mubr.f32.gmra.mrb[0].mxu0 %v1057
        %v1194 = vpop.f32.mrb[0].mxu0
        %v1195 = vadd.f32 0.0, %v1194
        %v1196 = vpop.f32.mrb[0].mxu0
        %1197 = vmatprep.mubr.f32.mxu0 0.0
        %1198 = vmatmul.mubr.f32.gmra.mrb[0].mxu0 %v1060
        %v1199 = vpop.f32.mrb[0].mxu0
        %v1200 = vadd.f32 0.0, %v1199
        %v1201 = vpop.f32.mrb[0].mxu0
        %1202 = vmatprep.mubr.f32.mxu0 0.0
        %1203 = vmatmul.mubr.f32.gmra.mrb[0].mxu0 %v1063
        %v1204 = vpop.f32.mrb[0].mxu0
        %v1205 = vadd.f32 0.0, %v1204
        %v1206 = vpop.f32.mrb[0].mxu0
        %1207 = vdwg.mxu0
        %v1208 = vadd.f32 %v989, %v1135
        %v1209 = vadd.f32 %v990, %v1140
        %v1210 = vadd.f32 %v991, %v1145
        %v1211 = vadd.f32 %v992, %v1150
        %v1212 = vadd.f32 %v993, %v1155
        %v1213 = vadd.f32 %v994, %v1160
        %v1214 = vadd.f32 %v995, %v1165
        %v1215 = vadd.f32 %v996, %v1170
        %v1216 = vadd.f32 %v997, %v1175
        %v1217 = vadd.f32 %v998, %v1180
        %v1218 = vadd.f32 %v999, %v1185
        %v1219 = vadd.f32 %v1000, %v1190
        %v1220 = vadd.f32 %v1001, %v1195
        %v1221 = vadd.f32 %v1002, %v1200
        %v1222 = vadd.f32 %v1003, %v1205
        %v1223 = vld [vmem:[#allocation2 + $0x11] sm:$0xff]
        %v1224 = vld [vmem:[#allocation2 + $0x19] sm:$0xff]
        %v1225 = vld [vmem:[#allocation2 + $0x21] sm:$0xff]
        %v1226 = vld [vmem:[#allocation2 + $0x29] sm:$0xff]
        %v1227 = vld [vmem:[#allocation2 + $0x31] sm:$0xff]
        %v1228 = vld [vmem:[#allocation2 + $0x39] sm:$0xff]
        %v1229 = vld [vmem:[#allocation2 + $0x41] sm:$0xff]
        %v1230 = vld [vmem:[#allocation2 + $0x49] sm:$0xff]
        %v1231 = vld [vmem:[#allocation2 + $0x51] sm:$0xff]
        %v1232 = vld [vmem:[#allocation2 + $0x59] sm:$0xff]
        %v1233 = vld [vmem:[#allocation2 + $0x61] sm:$0xff]
        %v1234 = vld [vmem:[#allocation2 + $0x69] sm:$0xff]
        %v1235 = vld [vmem:[#allocation2 + $0x71] sm:$0xff]
        %v1236 = vld [vmem:[#allocation2 + $0x79] sm:$0xff]
        %v1237 = vld [vmem:[#allocation2 + $0x81] sm:$0xff]
        %v1238 = vld [vmem:[%s2 + $0x10] sm:$0xf]
        %v1240 = vsel %vm350, %v1223, 0
        %v1243 = vsel %vm350, %v1224, 0
        %v1246 = vsel %vm350, %v1225, 0
        %v1249 = vsel %vm350, %v1226, 0
        %v1252 = vsel %vm350, %v1227, 0
        %v1255 = vsel %vm350, %v1228, 0
        %v1258 = vsel %vm350, %v1229, 0
        %v1261 = vsel %vm350, %v1230, 0
        %v1264 = vsel %vm350, %v1231, 0
        %v1267 = vsel %vm350, %v1232, 0
        %v1270 = vsel %vm350, %v1233, 0
        %v1273 = vsel %vm350, %v1234, 0
        %v1276 = vsel %vm350, %v1235, 0
        %v1279 = vsel %vm350, %v1236, 0
        %v1282 = vsel %vm350, %v1237, 0
        %v1285 = vsel %vm453, %v1238, 0
        %1287 = vmatprep.subr.mxu0 0.0
        %1288 = vmatpush1.msra.mxu0 %v1285
        %1289 = vmatprep.subr.mxu0 0.0
        %1290 = vmatpush1.msra.mxu0 0.0
        %1291 = vmatprep.subr.mxu0 0.0
        %1292 = vmatpush1.msra.mxu0 0.0
        %1293 = vmatprep.subr.mxu0 0.0
        %1294 = vmatpush1.msra.mxu0 0.0
        %1295 = vmatprep.subr.mxu0 0.0
        %1296 = vmatpush1.msra.mxu0 0.0
        %1297 = vmatprep.subr.mxu0 0.0
        %1298 = vmatpush1.msra.mxu0 0.0
        %1299 = vmatprep.subr.mxu0 0.0
        %1300 = vmatpush1.msra.mxu0 0.0
        %1301 = vmatprep.subr.mxu0 0.0
        %1302 = vmatpush1.msra.mxu0 0.0
        %1303 = vmatprep.subr.mxu0 0.0
        %1304 = vmatpush1.msra.mxu0 0.0
        %1305 = vmatprep.subr.mxu0 0.0
        %1306 = vmatpush1.msra.mxu0 0.0
        %1307 = vmatprep.subr.mxu0 0.0
        %1308 = vmatpush1.msra.mxu0 0.0
        %1309 = vmatprep.subr.mxu0 0.0
        %1310 = vmatpush1.msra.mxu0 0.0
        %1311 = vmatprep.subr.mxu0 0.0
        %1312 = vmatpush1.msra.mxu0 0.0
        %1313 = vmatprep.subr.mxu0 0.0
        %1314 = vmatpush1.msra.mxu0 0.0
        %1315 = vmatprep.subr.mxu0 0.0
        %1316 = vmatpush1.msra.mxu0 0.0
        %1317 = vmatprep.subr.mxu0 0.0
        %1318 = vmatpush1.msra.mxu0 0.0
        %1319 = vmatprep.subr.mxu0 0.0
        %1320 = vmatpush1.msra.mxu0 0.0
        %1321 = vmatprep.subr.mxu0 0.0
        %1322 = vmatpush1.msra.mxu0 0.0
        %1323 = vmatprep.subr.mxu0 0.0
        %1324 = vmatpush1.msra.mxu0 0.0
        %1325 = vmatprep.subr.mxu0 0.0
        %1326 = vmatpush1.msra.mxu0 0.0
        %1327 = vmatprep.subr.mxu0 0.0
        %1328 = vmatpush1.msra.mxu0 0.0
        %1329 = vmatprep.subr.mxu0 0.0
        %1330 = vmatpush1.msra.mxu0 0.0
        %1331 = vmatprep.subr.mxu0 0.0
        %1332 = vmatpush1.msra.mxu0 0.0
        %1333 = vmatprep.subr.mxu0 0.0
        %1334 = vmatpush1.msra.mxu0 0.0
        %1335 = vmatprep.subr.mxu0 0.0
        %1336 = vmatpush1.msra.mxu0 0.0
        %1337 = vmatprep.subr.mxu0 0.0
        %1338 = vmatpush1.msra.mxu0 0.0
        %1339 = vmatprep.subr.mxu0 0.0
        %1340 = vmatpush1.msra.mxu0 0.0
        %1341 = vmatprep.subr.mxu0 0.0
        %1342 = vmatpush1.msra.mxu0 0.0
        %1343 = vmatprep.subr.mxu0 0.0
        %1344 = vmatpush1.msra.mxu0 0.0
        %1345 = vmatprep.subr.mxu0 0.0
        %1346 = vmatpush1.msra.mxu0 0.0
        %1347 = vmatprep.subr.mxu0 0.0
        %1348 = vmatpush1.msra.mxu0 0.0
        %1349 = vmatprep.subr.mxu0 0.0
        %1350 = vmatpush1.msra.mxu0 0.0
        %1351 = vmatprep.mubr.f32.mxu0 0.0
        %1352 = vmatmul.mubr.f32.gmra.mrb[0].mxu0 %v1240
        %v1353 = vpop.f32.mrb[0].mxu0
        %v1354 = vadd.f32 0.0, %v1353
        %v1355 = vpop.f32.mrb[0].mxu0
        %1356 = vmatprep.mubr.f32.mxu0 0.0
        %1357 = vmatmul.mubr.f32.gmra.mrb[0].mxu0 %v1243
        %v1358 = vpop.f32.mrb[0].mxu0
        %v1359 = vadd.f32 0.0, %v1358
        %v1360 = vpop.f32.mrb[0].mxu0
        %1361 = vmatprep.mubr.f32.mxu0 0.0
        %1362 = vmatmul.mubr.f32.gmra.mrb[0].mxu0 %v1246
        %v1363 = vpop.f32.mrb[0].mxu0
        %v1364 = vadd.f32 0.0, %v1363
        %v1365 = vpop.f32.mrb[0].mxu0
        %1366 = vmatprep.mubr.f32.mxu0 0.0
        %1367 = vmatmul.mubr.f32.gmra.mrb[0].mxu0 %v1249
        %v1368 = vpop.f32.mrb[0].mxu0
        %v1369 = vadd.f32 0.0, %v1368
        %v1370 = vpop.f32.mrb[0].mxu0
        %1371 = vmatprep.mubr.f32.mxu0 0.0
        %1372 = vmatmul.mubr.f32.gmra.mrb[0].mxu0 %v1252
        %v1373 = vpop.f32.mrb[0].mxu0
        %v1374 = vadd.f32 0.0, %v1373
        %v1375 = vpop.f32.mrb[0].mxu0
        %1376 = vmatprep.mubr.f32.mxu0 0.0
        %1377 = vmatmul.mubr.f32.gmra.mrb[0].mxu0 %v1255
        %v1378 = vpop.f32.mrb[0].mxu0
        %v1379 = vadd.f32 0.0, %v1378
        %v1380 = vpop.f32.mrb[0].mxu0
        %1381 = vmatprep.mubr.f32.mxu0 0.0
        %1382 = vmatmul.mubr.f32.gmra.mrb[0].mxu0 %v1258
        %v1383 = vpop.f32.mrb[0].mxu0
        %v1384 = vadd.f32 0.0, %v1383
        %v1385 = vpop.f32.mrb[0].mxu0
        %1386 = vmatprep.mubr.f32.mxu0 0.0
        %1387 = vmatmul.mubr.f32.gmra.mrb[0].mxu0 %v1261
        %v1388 = vpop.f32.mrb[0].mxu0
        %v1389 = vadd.f32 0.0, %v1388
        %v1390 = vpop.f32.mrb[0].mxu0
        %1391 = vmatprep.mubr.f32.mxu0 0.0
        %1392 = vmatmul.mubr.f32.gmra.mrb[0].mxu0 %v1264
        %v1393 = vpop.f32.mrb[0].mxu0
        %v1394 = vadd.f32 0.0, %v1393
        %v1395 = vpop.f32.mrb[0].mxu0
        %1396 = vmatprep.mubr.f32.mxu0 0.0
        %1397 = vmatmul.mubr.f32.gmra.mrb[0].mxu0 %v1267
        %v1398 = vpop.f32.mrb[0].mxu0
        %v1399 = vadd.f32 0.0, %v1398
        %v1400 = vpop.f32.mrb[0].mxu0
        %1401 = vmatprep.mubr.f32.mxu0 0.0
        %1402 = vmatmul.mubr.f32.gmra.mrb[0].mxu0 %v1270
        %v1403 = vpop.f32.mrb[0].mxu0
        %v1404 = vadd.f32 0.0, %v1403
        %v1405 = vpop.f32.mrb[0].mxu0
        %1406 = vmatprep.mubr.f32.mxu0 0.0
        %1407 = vmatmul.mubr.f32.gmra.mrb[0].mxu0 %v1273
        %v1408 = vpop.f32.mrb[0].mxu0
        %v1409 = vadd.f32 0.0, %v1408
        %v1410 = vpop.f32.mrb[0].mxu0
        %1411 = vmatprep.mubr.f32.mxu0 0.0
        %1412 = vmatmul.mubr.f32.gmra.mrb[0].mxu0 %v1276
        %v1413 = vpop.f32.mrb[0].mxu0
        %v1414 = vadd.f32 0.0, %v1413
        %v1415 = vpop.f32.mrb[0].mxu0
        %1416 = vmatprep.mubr.f32.mxu0 0.0
        %1417 = vmatmul.mubr.f32.gmra.mrb[0].mxu0 %v1279
        %v1418 = vpop.f32.mrb[0].mxu0
        %v1419 = vadd.f32 0.0, %v1418
        %v1420 = vpop.f32.mrb[0].mxu0
        %1421 = vmatprep.mubr.f32.mxu0 0.0
        %1422 = vmatmul.mubr.f32.gmra.mrb[0].mxu0 %v1282
        %v1423 = vpop.f32.mrb[0].mxu0
        %v1424 = vadd.f32 0.0, %v1423
        %v1425 = vpop.f32.mrb[0].mxu0
        %1426 = vdwg.mxu0
        %v1427 = vadd.f32 %v1208, %v1354
        %v1428 = vadd.f32 %v1209, %v1359
        %v1429 = vadd.f32 %v1210, %v1364
        %v1430 = vadd.f32 %v1211, %v1369
        %v1431 = vadd.f32 %v1212, %v1374
        %v1432 = vadd.f32 %v1213, %v1379
        %v1433 = vadd.f32 %v1214, %v1384
        %v1434 = vadd.f32 %v1215, %v1389
        %v1435 = vadd.f32 %v1216, %v1394
        %v1436 = vadd.f32 %v1217, %v1399
        %v1437 = vadd.f32 %v1218, %v1404
        %v1438 = vadd.f32 %v1219, %v1409
        %v1439 = vadd.f32 %v1220, %v1414
        %v1440 = vadd.f32 %v1221, %v1419
        %v1441 = vadd.f32 %v1222, %v1424
        %v1442 = vld [vmem:[#allocation2 + $0x12] sm:$0xff]
        %v1443 = vld [vmem:[#allocation2 + $0x1a] sm:$0xff]
        %v1444 = vld [vmem:[#allocation2 + $0x22] sm:$0xff]
        %v1445 = vld [vmem:[#allocation2 + $0x2a] sm:$0xff]
        %v1446 = vld [vmem:[#allocation2 + $0x32] sm:$0xff]
        %v1447 = vld [vmem:[#allocation2 + $0x3a] sm:$0xff]
        %v1448 = vld [vmem:[#allocation2 + $0x42] sm:$0xff]
        %v1449 = vld [vmem:[#allocation2 + $0x4a] sm:$0xff]
        %v1450 = vld [vmem:[#allocation2 + $0x52] sm:$0xff]
        %v1451 = vld [vmem:[#allocation2 + $0x5a] sm:$0xff]
        %v1452 = vld [vmem:[#allocation2 + $0x62] sm:$0xff]
        %v1453 = vld [vmem:[#allocation2 + $0x6a] sm:$0xff]
        %v1454 = vld [vmem:[#allocation2 + $0x72] sm:$0xff]
        %v1455 = vld [vmem:[#allocation2 + $0x7a] sm:$0xff]
        %v1456 = vld [vmem:[#allocation2 + $0x82] sm:$0xff]
        %v1457 = vld [vmem:[%s2 + $0x14] sm:$0xf]
        %v1459 = vsel %vm350, %v1442, 0
        %v1462 = vsel %vm350, %v1443, 0
        %v1465 = vsel %vm350, %v1444, 0
        %v1468 = vsel %vm350, %v1445, 0
        %v1471 = vsel %vm350, %v1446, 0
        %v1474 = vsel %vm350, %v1447, 0
        %v1477 = vsel %vm350, %v1448, 0
        %v1480 = vsel %vm350, %v1449, 0
        %v1483 = vsel %vm350, %v1450, 0
        %v1486 = vsel %vm350, %v1451, 0
        %v1489 = vsel %vm350, %v1452, 0
        %v1492 = vsel %vm350, %v1453, 0
        %v1495 = vsel %vm350, %v1454, 0
        %v1498 = vsel %vm350, %v1455, 0
        %v1501 = vsel %vm350, %v1456, 0
        %v1504 = vsel %vm453, %v1457, 0
        %1506 = vmatprep.subr.mxu0 0.0
        %1507 = vmatpush1.msra.mxu0 %v1504
        %1508 = vmatprep.subr.mxu0 0.0
        %1509 = vmatpush1.msra.mxu0 0.0
        %1510 = vmatprep.subr.mxu0 0.0
        %1511 = vmatpush1.msra.mxu0 0.0
        %1512 = vmatprep.subr.mxu0 0.0
        %1513 = vmatpush1.msra.mxu0 0.0
        %1514 = vmatprep.subr.mxu0 0.0
        %1515 = vmatpush1.msra.mxu0 0.0
        %1516 = vmatprep.subr.mxu0 0.0
        %1517 = vmatpush1.msra.mxu0 0.0
        %1518 = vmatprep.subr.mxu0 0.0
        %1519 = vmatpush1.msra.mxu0 0.0
        %1520 = vmatprep.subr.mxu0 0.0
        %1521 = vmatpush1.msra.mxu0 0.0
        %1522 = vmatprep.subr.mxu0 0.0
        %1523 = vmatpush1.msra.mxu0 0.0
        %1524 = vmatprep.subr.mxu0 0.0
        %1525 = vmatpush1.msra.mxu0 0.0
        %1526 = vmatprep.subr.mxu0 0.0
        %1527 = vmatpush1.msra.mxu0 0.0
        %1528 = vmatprep.subr.mxu0 0.0
        %1529 = vmatpush1.msra.mxu0 0.0
        %1530 = vmatprep.subr.mxu0 0.0
        %1531 = vmatpush1.msra.mxu0 0.0
        %1532 = vmatprep.subr.mxu0 0.0
        %1533 = vmatpush1.msra.mxu0 0.0
        %1534 = vmatprep.subr.mxu0 0.0
        %1535 = vmatpush1.msra.mxu0 0.0
        %1536 = vmatprep.subr.mxu0 0.0
        %1537 = vmatpush1.msra.mxu0 0.0
        %1538 = vmatprep.subr.mxu0 0.0
        %1539 = vmatpush1.msra.mxu0 0.0
        %1540 = vmatprep.subr.mxu0 0.0
        %1541 = vmatpush1.msra.mxu0 0.0
        %1542 = vmatprep.subr.mxu0 0.0
        %1543 = vmatpush1.msra.mxu0 0.0
        %1544 = vmatprep.subr.mxu0 0.0
        %1545 = vmatpush1.msra.mxu0 0.0
        %1546 = vmatprep.subr.mxu0 0.0
        %1547 = vmatpush1.msra.mxu0 0.0
        %1548 = vmatprep.subr.mxu0 0.0
        %1549 = vmatpush1.msra.mxu0 0.0
        %1550 = vmatprep.subr.mxu0 0.0
        %1551 = vmatpush1.msra.mxu0 0.0
        %1552 = vmatprep.subr.mxu0 0.0
        %1553 = vmatpush1.msra.mxu0 0.0
        %1554 = vmatprep.subr.mxu0 0.0
        %1555 = vmatpush1.msra.mxu0 0.0
        %1556 = vmatprep.subr.mxu0 0.0
        %1557 = vmatpush1.msra.mxu0 0.0
        %1558 = vmatprep.subr.mxu0 0.0
        %1559 = vmatpush1.msra.mxu0 0.0
        %1560 = vmatprep.subr.mxu0 0.0
        %1561 = vmatpush1.msra.mxu0 0.0
        %1562 = vmatprep.subr.mxu0 0.0
        %1563 = vmatpush1.msra.mxu0 0.0
        %1564 = vmatprep.subr.mxu0 0.0
        %1565 = vmatpush1.msra.mxu0 0.0
        %1566 = vmatprep.subr.mxu0 0.0
        %1567 = vmatpush1.msra.mxu0 0.0
        %1568 = vmatprep.subr.mxu0 0.0
        %1569 = vmatpush1.msra.mxu0 0.0
        %1570 = vmatprep.mubr.f32.mxu0 0.0
        %1571 = vmatmul.mubr.f32.gmra.mrb[0].mxu0 %v1459
        %v1572 = vpop.f32.mrb[0].mxu0
        %v1573 = vadd.f32 0.0, %v1572
        %v1574 = vpop.f32.mrb[0].mxu0
        %1575 = vmatprep.mubr.f32.mxu0 0.0
        %1576 = vmatmul.mubr.f32.gmra.mrb[0].mxu0 %v1462
        %v1577 = vpop.f32.mrb[0].mxu0
        %v1578 = vadd.f32 0.0, %v1577
        %v1579 = vpop.f32.mrb[0].mxu0
        %1580 = vmatprep.mubr.f32.mxu0 0.0
        %1581 = vmatmul.mubr.f32.gmra.mrb[0].mxu0 %v1465
        %v1582 = vpop.f32.mrb[0].mxu0
        %v1583 = vadd.f32 0.0, %v1582
        %v1584 = vpop.f32.mrb[0].mxu0
        %1585 = vmatprep.mubr.f32.mxu0 0.0
        %1586 = vmatmul.mubr.f32.gmra.mrb[0].mxu0 %v1468
        %v1587 = vpop.f32.mrb[0].mxu0
        %v1588 = vadd.f32 0.0, %v1587
        %v1589 = vpop.f32.mrb[0].mxu0
        %1590 = vmatprep.mubr.f32.mxu0 0.0
        %1591 = vmatmul.mubr.f32.gmra.mrb[0].mxu0 %v1471
        %v1592 = vpop.f32.mrb[0].mxu0
        %v1593 = vadd.f32 0.0, %v1592
        %v1594 = vpop.f32.mrb[0].mxu0
        %1595 = vmatprep.mubr.f32.mxu0 0.0
        %1596 = vmatmul.mubr.f32.gmra.mrb[0].mxu0 %v1474
        %v1597 = vpop.f32.mrb[0].mxu0
        %v1598 = vadd.f32 0.0, %v1597
        %v1599 = vpop.f32.mrb[0].mxu0
        %1600 = vmatprep.mubr.f32.mxu0 0.0
        %1601 = vmatmul.mubr.f32.gmra.mrb[0].mxu0 %v1477
        %v1602 = vpop.f32.mrb[0].mxu0
        %v1603 = vadd.f32 0.0, %v1602
        %v1604 = vpop.f32.mrb[0].mxu0
        %1605 = vmatprep.mubr.f32.mxu0 0.0
        %1606 = vmatmul.mubr.f32.gmra.mrb[0].mxu0 %v1480
        %v1607 = vpop.f32.mrb[0].mxu0
        %v1608 = vadd.f32 0.0, %v1607
        %v1609 = vpop.f32.mrb[0].mxu0
        %1610 = vmatprep.mubr.f32.mxu0 0.0
        %1611 = vmatmul.mubr.f32.gmra.mrb[0].mxu0 %v1483
        %v1612 = vpop.f32.mrb[0].mxu0
        %v1613 = vadd.f32 0.0, %v1612
        %v1614 = vpop.f32.mrb[0].mxu0
        %1615 = vmatprep.mubr.f32.mxu0 0.0
        %1616 = vmatmul.mubr.f32.gmra.mrb[0].mxu0 %v1486
        %v1617 = vpop.f32.mrb[0].mxu0
        %v1618 = vadd.f32 0.0, %v1617
        %v1619 = vpop.f32.mrb[0].mxu0
        %1620 = vmatprep.mubr.f32.mxu0 0.0
        %1621 = vmatmul.mubr.f32.gmra.mrb[0].mxu0 %v1489
        %v1622 = vpop.f32.mrb[0].mxu0
        %v1623 = vadd.f32 0.0, %v1622
        %v1624 = vpop.f32.mrb[0].mxu0
        %1625 = vmatprep.mubr.f32.mxu0 0.0
        %1626 = vmatmul.mubr.f32.gmra.mrb[0].mxu0 %v1492
        %v1627 = vpop.f32.mrb[0].mxu0
        %v1628 = vadd.f32 0.0, %v1627
        %v1629 = vpop.f32.mrb[0].mxu0
        %1630 = vmatprep.mubr.f32.mxu0 0.0
        %1631 = vmatmul.mubr.f32.gmra.mrb[0].mxu0 %v1495
        %v1632 = vpop.f32.mrb[0].mxu0
        %v1633 = vadd.f32 0.0, %v1632
        %v1634 = vpop.f32.mrb[0].mxu0
        %1635 = vmatprep.mubr.f32.mxu0 0.0
        %1636 = vmatmul.mubr.f32.gmra.mrb[0].mxu0 %v1498
        %v1637 = vpop.f32.mrb[0].mxu0
        %v1638 = vadd.f32 0.0, %v1637
        %v1639 = vpop.f32.mrb[0].mxu0
        %1640 = vmatprep.mubr.f32.mxu0 0.0
        %1641 = vmatmul.mubr.f32.gmra.mrb[0].mxu0 %v1501
        %v1642 = vpop.f32.mrb[0].mxu0
        %v1643 = vadd.f32 0.0, %v1642
        %v1644 = vpop.f32.mrb[0].mxu0
        %1645 = vdwg.mxu0
        %v1646 = vadd.f32 %v1427, %v1573
        %v1647 = vadd.f32 %v1428, %v1578
        %v1648 = vadd.f32 %v1429, %v1583
        %v1649 = vadd.f32 %v1430, %v1588
        %v1650 = vadd.f32 %v1431, %v1593
        %v1651 = vadd.f32 %v1432, %v1598
        %v1652 = vadd.f32 %v1433, %v1603
        %v1653 = vadd.f32 %v1434, %v1608
        %v1654 = vadd.f32 %v1435, %v1613
        %v1655 = vadd.f32 %v1436, %v1618
        %v1656 = vadd.f32 %v1437, %v1623
        %v1657 = vadd.f32 %v1438, %v1628
        %v1658 = vadd.f32 %v1439, %v1633
        %v1659 = vadd.f32 %v1440, %v1638
        %v1660 = vadd.f32 %v1441, %v1643
        %v1661 = vld [vmem:[#allocation2 + $0x20] sm:$0xff]
        %v1662 = vld [vmem:[#allocation2 + $0x28] sm:$0xff]
        %v1663 = vld [vmem:[#allocation2 + $0x30] sm:$0xff]
        %v1664 = vld [vmem:[#allocation2 + $0x38] sm:$0xff]
        %v1665 = vld [vmem:[#allocation2 + $0x40] sm:$0xff]
        %v1666 = vld [vmem:[#allocation2 + $0x48] sm:$0xff]
        %v1667 = vld [vmem:[#allocation2 + $0x50] sm:$0xff]
        %v1668 = vld [vmem:[#allocation2 + $0x58] sm:$0xff]
        %v1669 = vld [vmem:[#allocation2 + $0x60] sm:$0xff]
        %v1670 = vld [vmem:[#allocation2 + $0x68] sm:$0xff]
        %v1671 = vld [vmem:[#allocation2 + $0x70] sm:$0xff]
        %v1672 = vld [vmem:[#allocation2 + $0x78] sm:$0xff]
        %v1673 = vld [vmem:[#allocation2 + $0x80] sm:$0xff]
        %v1674 = vld [vmem:[#allocation2 + $0x88] sm:$0xff]
        %v1675 = vld [vmem:[#allocation2 + $0x90] sm:$0xff]
        %v1676 = vld [vmem:[%s2 + $0x18] sm:$0xf]
        %v1678 = vsel %vm350, %v1661, 0
        %v1681 = vsel %vm350, %v1662, 0
        %v1684 = vsel %vm350, %v1663, 0
        %v1687 = vsel %vm350, %v1664, 0
        %v1690 = vsel %vm350, %v1665, 0
        %v1693 = vsel %vm350, %v1666, 0
        %v1696 = vsel %vm350, %v1667, 0
        %v1699 = vsel %vm350, %v1668, 0
        %v1702 = vsel %vm350, %v1669, 0
        %v1705 = vsel %vm350, %v1670, 0
        %v1708 = vsel %vm350, %v1671, 0
        %v1711 = vsel %vm350, %v1672, 0
        %v1714 = vsel %vm350, %v1673, 0
        %v1717 = vsel %vm350, %v1674, 0
        %v1720 = vsel %vm350, %v1675, 0
        %v1723 = vsel %vm453, %v1676, 0
        %1725 = vmatprep.subr.mxu0 0.0
        %1726 = vmatpush1.msra.mxu0 %v1723
        %1727 = vmatprep.subr.mxu0 0.0
        %1728 = vmatpush1.msra.mxu0 0.0
        %1729 = vmatprep.subr.mxu0 0.0
        %1730 = vmatpush1.msra.mxu0 0.0
        %1731 = vmatprep.subr.mxu0 0.0
        %1732 = vmatpush1.msra.mxu0 0.0
        %1733 = vmatprep.subr.mxu0 0.0
        %1734 = vmatpush1.msra.mxu0 0.0
        %1735 = vmatprep.subr.mxu0 0.0
        %1736 = vmatpush1.msra.mxu0 0.0
        %1737 = vmatprep.subr.mxu0 0.0
        %1738 = vmatpush1.msra.mxu0 0.0
        %1739 = vmatprep.subr.mxu0 0.0
        %1740 = vmatpush1.msra.mxu0 0.0
        %1741 = vmatprep.subr.mxu0 0.0
        %1742 = vmatpush1.msra.mxu0 0.0
        %1743 = vmatprep.subr.mxu0 0.0
        %1744 = vmatpush1.msra.mxu0 0.0
        %1745 = vmatprep.subr.mxu0 0.0
        %1746 = vmatpush1.msra.mxu0 0.0
        %1747 = vmatprep.subr.mxu0 0.0
        %1748 = vmatpush1.msra.mxu0 0.0
        %1749 = vmatprep.subr.mxu0 0.0
        %1750 = vmatpush1.msra.mxu0 0.0
        %1751 = vmatprep.subr.mxu0 0.0
        %1752 = vmatpush1.msra.mxu0 0.0
        %1753 = vmatprep.subr.mxu0 0.0
        %1754 = vmatpush1.msra.mxu0 0.0
        %1755 = vmatprep.subr.mxu0 0.0
        %1756 = vmatpush1.msra.mxu0 0.0
        %1757 = vmatprep.subr.mxu0 0.0
        %1758 = vmatpush1.msra.mxu0 0.0
        %1759 = vmatprep.subr.mxu0 0.0
        %1760 = vmatpush1.msra.mxu0 0.0
        %1761 = vmatprep.subr.mxu0 0.0
        %1762 = vmatpush1.msra.mxu0 0.0
        %1763 = vmatprep.subr.mxu0 0.0
        %1764 = vmatpush1.msra.mxu0 0.0
        %1765 = vmatprep.subr.mxu0 0.0
        %1766 = vmatpush1.msra.mxu0 0.0
        %1767 = vmatprep.subr.mxu0 0.0
        %1768 = vmatpush1.msra.mxu0 0.0
        %1769 = vmatprep.subr.mxu0 0.0
        %1770 = vmatpush1.msra.mxu0 0.0
        %1771 = vmatprep.subr.mxu0 0.0
        %1772 = vmatpush1.msra.mxu0 0.0
        %1773 = vmatprep.subr.mxu0 0.0
        %1774 = vmatpush1.msra.mxu0 0.0
        %1775 = vmatprep.subr.mxu0 0.0
        %1776 = vmatpush1.msra.mxu0 0.0
        %1777 = vmatprep.subr.mxu0 0.0
        %1778 = vmatpush1.msra.mxu0 0.0
        %1779 = vmatprep.subr.mxu0 0.0
        %1780 = vmatpush1.msra.mxu0 0.0
        %1781 = vmatprep.subr.mxu0 0.0
        %1782 = vmatpush1.msra.mxu0 0.0
        %1783 = vmatprep.subr.mxu0 0.0
        %1784 = vmatpush1.msra.mxu0 0.0
        %1785 = vmatprep.subr.mxu0 0.0
        %1786 = vmatpush1.msra.mxu0 0.0
        %1787 = vmatprep.subr.mxu0 0.0
        %1788 = vmatpush1.msra.mxu0 0.0
        %1789 = vmatprep.mubr.f32.mxu0 0.0
        %1790 = vmatmul.mubr.f32.gmra.mrb[0].mxu0 %v1678
        %v1791 = vpop.f32.mrb[0].mxu0
        %v1792 = vadd.f32 0.0, %v1791
        %v1793 = vpop.f32.mrb[0].mxu0
        %1794 = vmatprep.mubr.f32.mxu0 0.0
        %1795 = vmatmul.mubr.f32.gmra.mrb[0].mxu0 %v1681
        %v1796 = vpop.f32.mrb[0].mxu0
        %v1797 = vadd.f32 0.0, %v1796
        %v1798 = vpop.f32.mrb[0].mxu0
        %1799 = vmatprep.mubr.f32.mxu0 0.0
        %1800 = vmatmul.mubr.f32.gmra.mrb[0].mxu0 %v1684
        %v1801 = vpop.f32.mrb[0].mxu0
        %v1802 = vadd.f32 0.0, %v1801
        %v1803 = vpop.f32.mrb[0].mxu0
        %1804 = vmatprep.mubr.f32.mxu0 0.0
        %1805 = vmatmul.mubr.f32.gmra.mrb[0].mxu0 %v1687
        %v1806 = vpop.f32.mrb[0].mxu0
        %v1807 = vadd.f32 0.0, %v1806
        %v1808 = vpop.f32.mrb[0].mxu0
        %1809 = vmatprep.mubr.f32.mxu0 0.0
        %1810 = vmatmul.mubr.f32.gmra.mrb[0].mxu0 %v1690
        %v1811 = vpop.f32.mrb[0].mxu0
        %v1812 = vadd.f32 0.0, %v1811
        %v1813 = vpop.f32.mrb[0].mxu0
        %1814 = vmatprep.mubr.f32.mxu0 0.0
        %1815 = vmatmul.mubr.f32.gmra.mrb[0].mxu0 %v1693
        %v1816 = vpop.f32.mrb[0].mxu0
        %v1817 = vadd.f32 0.0, %v1816
        %v1818 = vpop.f32.mrb[0].mxu0
        %1819 = vmatprep.mubr.f32.mxu0 0.0
        %1820 = vmatmul.mubr.f32.gmra.mrb[0].mxu0 %v1696
        %v1821 = vpop.f32.mrb[0].mxu0
        %v1822 = vadd.f32 0.0, %v1821
        %v1823 = vpop.f32.mrb[0].mxu0
        %1824 = vmatprep.mubr.f32.mxu0 0.0
        %1825 = vmatmul.mubr.f32.gmra.mrb[0].mxu0 %v1699
        %v1826 = vpop.f32.mrb[0].mxu0
        %v1827 = vadd.f32 0.0, %v1826
        %v1828 = vpop.f32.mrb[0].mxu0
        %1829 = vmatprep.mubr.f32.mxu0 0.0
        %1830 = vmatmul.mubr.f32.gmra.mrb[0].mxu0 %v1702
        %v1831 = vpop.f32.mrb[0].mxu0
        %v1832 = vadd.f32 0.0, %v1831
        %v1833 = vpop.f32.mrb[0].mxu0
        %1834 = vmatprep.mubr.f32.mxu0 0.0
        %1835 = vmatmul.mubr.f32.gmra.mrb[0].mxu0 %v1705
        %v1836 = vpop.f32.mrb[0].mxu0
        %v1837 = vadd.f32 0.0, %v1836
        %v1838 = vpop.f32.mrb[0].mxu0
        %1839 = vmatprep.mubr.f32.mxu0 0.0
        %1840 = vmatmul.mubr.f32.gmra.mrb[0].mxu0 %v1708
        %v1841 = vpop.f32.mrb[0].mxu0
        %v1842 = vadd.f32 0.0, %v1841
        %v1843 = vpop.f32.mrb[0].mxu0
        %1844 = vmatprep.mubr.f32.mxu0 0.0
        %1845 = vmatmul.mubr.f32.gmra.mrb[0].mxu0 %v1711
        %v1846 = vpop.f32.mrb[0].mxu0
        %v1847 = vadd.f32 0.0, %v1846
        %v1848 = vpop.f32.mrb[0].mxu0
        %1849 = vmatprep.mubr.f32.mxu0 0.0
        %1850 = vmatmul.mubr.f32.gmra.mrb[0].mxu0 %v1714
        %v1851 = vpop.f32.mrb[0].mxu0
        %v1852 = vadd.f32 0.0, %v1851
        %v1853 = vpop.f32.mrb[0].mxu0
        %1854 = vmatprep.mubr.f32.mxu0 0.0
        %1855 = vmatmul.mubr.f32.gmra.mrb[0].mxu0 %v1717
        %v1856 = vpop.f32.mrb[0].mxu0
        %v1857 = vadd.f32 0.0, %v1856
        %v1858 = vpop.f32.mrb[0].mxu0
        %1859 = vmatprep.mubr.f32.mxu0 0.0
        %1860 = vmatmul.mubr.f32.gmra.mrb[0].mxu0 %v1720
        %v1861 = vpop.f32.mrb[0].mxu0
        %v1862 = vadd.f32 0.0, %v1861
        %v1863 = vpop.f32.mrb[0].mxu0
        %1864 = vdwg.mxu0
        %v1865 = vadd.f32 %v1646, %v1792
        %v1866 = vadd.f32 %v1647, %v1797
        %v1867 = vadd.f32 %v1648, %v1802
        %v1868 = vadd.f32 %v1649, %v1807
        %v1869 = vadd.f32 %v1650, %v1812
        %v1870 = vadd.f32 %v1651, %v1817
        %v1871 = vadd.f32 %v1652, %v1822
        %v1872 = vadd.f32 %v1653, %v1827
        %v1873 = vadd.f32 %v1654, %v1832
        %v1874 = vadd.f32 %v1655, %v1837
        %v1875 = vadd.f32 %v1656, %v1842
        %v1876 = vadd.f32 %v1657, %v1847
        %v1877 = vadd.f32 %v1658, %v1852
        %v1878 = vadd.f32 %v1659, %v1857
        %v1879 = vadd.f32 %v1660, %v1862
        %v1880 = vld [vmem:[#allocation2 + $0x21] sm:$0xff]
        %v1881 = vld [vmem:[#allocation2 + $0x29] sm:$0xff]
        %v1882 = vld [vmem:[#allocation2 + $0x31] sm:$0xff]
        %v1883 = vld [vmem:[#allocation2 + $0x39] sm:$0xff]
        %v1884 = vld [vmem:[#allocation2 + $0x41] sm:$0xff]
        %v1885 = vld [vmem:[#allocation2 + $0x49] sm:$0xff]
        %v1886 = vld [vmem:[#allocation2 + $0x51] sm:$0xff]
        %v1887 = vld [vmem:[#allocation2 + $0x59] sm:$0xff]
        %v1888 = vld [vmem:[#allocation2 + $0x61] sm:$0xff]
        %v1889 = vld [vmem:[#allocation2 + $0x69] sm:$0xff]
        %v1890 = vld [vmem:[#allocation2 + $0x71] sm:$0xff]
        %v1891 = vld [vmem:[#allocation2 + $0x79] sm:$0xff]
        %v1892 = vld [vmem:[#allocation2 + $0x81] sm:$0xff]
        %v1893 = vld [vmem:[#allocation2 + $0x89] sm:$0xff]
        %v1894 = vld [vmem:[#allocation2 + $0x91] sm:$0xff]
        %v1895 = vld [vmem:[%s2 + $0x1c] sm:$0xf]
        %v1897 = vsel %vm350, %v1880, 0
        %v1900 = vsel %vm350, %v1881, 0
        %v1903 = vsel %vm350, %v1882, 0
        %v1906 = vsel %vm350, %v1883, 0
        %v1909 = vsel %vm350, %v1884, 0
        %v1912 = vsel %vm350, %v1885, 0
        %v1915 = vsel %vm350, %v1886, 0
        %v1918 = vsel %vm350, %v1887, 0
        %v1921 = vsel %vm350, %v1888, 0
        %v1924 = vsel %vm350, %v1889, 0
        %v1927 = vsel %vm350, %v1890, 0
        %v1930 = vsel %vm350, %v1891, 0
        %v1933 = vsel %vm350, %v1892, 0
        %v1936 = vsel %vm350, %v1893, 0
        %v1939 = vsel %vm350, %v1894, 0
        %v1942 = vsel %vm453, %v1895, 0
        %1944 = vmatprep.subr.mxu0 0.0
        %1945 = vmatpush1.msra.mxu0 %v1942
        %1946 = vmatprep.subr.mxu0 0.0
        %1947 = vmatpush1.msra.mxu0 0.0
        %1948 = vmatprep.subr.mxu0 0.0
        %1949 = vmatpush1.msra.mxu0 0.0
        %1950 = vmatprep.subr.mxu0 0.0
        %1951 = vmatpush1.msra.mxu0 0.0
        %1952 = vmatprep.subr.mxu0 0.0
        %1953 = vmatpush1.msra.mxu0 0.0
        %1954 = vmatprep.subr.mxu0 0.0
        %1955 = vmatpush1.msra.mxu0 0.0
        %1956 = vmatprep.subr.mxu0 0.0
        %1957 = vmatpush1.msra.mxu0 0.0
        %1958 = vmatprep.subr.mxu0 0.0
        %1959 = vmatpush1.msra.mxu0 0.0
        %1960 = vmatprep.subr.mxu0 0.0
        %1961 = vmatpush1.msra.mxu0 0.0
        %1962 = vmatprep.subr.mxu0 0.0
        %1963 = vmatpush1.msra.mxu0 0.0
        %1964 = vmatprep.subr.mxu0 0.0
        %1965 = vmatpush1.msra.mxu0 0.0
        %1966 = vmatprep.subr.mxu0 0.0
        %1967 = vmatpush1.msra.mxu0 0.0
        %1968 = vmatprep.subr.mxu0 0.0
        %1969 = vmatpush1.msra.mxu0 0.0
        %1970 = vmatprep.subr.mxu0 0.0
        %1971 = vmatpush1.msra.mxu0 0.0
        %1972 = vmatprep.subr.mxu0 0.0
        %1973 = vmatpush1.msra.mxu0 0.0
        %1974 = vmatprep.subr.mxu0 0.0
        %1975 = vmatpush1.msra.mxu0 0.0
        %1976 = vmatprep.subr.mxu0 0.0
        %1977 = vmatpush1.msra.mxu0 0.0
        %1978 = vmatprep.subr.mxu0 0.0
        %1979 = vmatpush1.msra.mxu0 0.0
        %1980 = vmatprep.subr.mxu0 0.0
        %1981 = vmatpush1.msra.mxu0 0.0
        %1982 = vmatprep.subr.mxu0 0.0
        %1983 = vmatpush1.msra.mxu0 0.0
        %1984 = vmatprep.subr.mxu0 0.0
        %1985 = vmatpush1.msra.mxu0 0.0
        %1986 = vmatprep.subr.mxu0 0.0
        %1987 = vmatpush1.msra.mxu0 0.0
        %1988 = vmatprep.subr.mxu0 0.0
        %1989 = vmatpush1.msra.mxu0 0.0
        %1990 = vmatprep.subr.mxu0 0.0
        %1991 = vmatpush1.msra.mxu0 0.0
        %1992 = vmatprep.subr.mxu0 0.0
        %1993 = vmatpush1.msra.mxu0 0.0
        %1994 = vmatprep.subr.mxu0 0.0
        %1995 = vmatpush1.msra.mxu0 0.0
        %1996 = vmatprep.subr.mxu0 0.0
        %1997 = vmatpush1.msra.mxu0 0.0
        %1998 = vmatprep.subr.mxu0 0.0
        %1999 = vmatpush1.msra.mxu0 0.0
        %2000 = vmatprep.subr.mxu0 0.0
        %2001 = vmatpush1.msra.mxu0 0.0
        %2002 = vmatprep.subr.mxu0 0.0
        %2003 = vmatpush1.msra.mxu0 0.0
        %2004 = vmatprep.subr.mxu0 0.0
        %2005 = vmatpush1.msra.mxu0 0.0
        %2006 = vmatprep.subr.mxu0 0.0
        %2007 = vmatpush1.msra.mxu0 0.0
        %2008 = vmatprep.mubr.f32.mxu0 0.0
        %2009 = vmatmul.mubr.f32.gmra.mrb[0].mxu0 %v1897
        %v2010 = vpop.f32.mrb[0].mxu0
        %v2011 = vadd.f32 0.0, %v2010
        %v2012 = vpop.f32.mrb[0].mxu0
        %2013 = vmatprep.mubr.f32.mxu0 0.0
        %2014 = vmatmul.mubr.f32.gmra.mrb[0].mxu0 %v1900
        %v2015 = vpop.f32.mrb[0].mxu0
        %v2016 = vadd.f32 0.0, %v2015
        %v2017 = vpop.f32.mrb[0].mxu0
        %2018 = vmatprep.mubr.f32.mxu0 0.0
        %2019 = vmatmul.mubr.f32.gmra.mrb[0].mxu0 %v1903
        %v2020 = vpop.f32.mrb[0].mxu0
        %v2021 = vadd.f32 0.0, %v2020
        %v2022 = vpop.f32.mrb[0].mxu0
        %2023 = vmatprep.mubr.f32.mxu0 0.0
        %2024 = vmatmul.mubr.f32.gmra.mrb[0].mxu0 %v1906
        %v2025 = vpop.f32.mrb[0].mxu0
        %v2026 = vadd.f32 0.0, %v2025
        %v2027 = vpop.f32.mrb[0].mxu0
        %2028 = vmatprep.mubr.f32.mxu0 0.0
        %2029 = vmatmul.mubr.f32.gmra.mrb[0].mxu0 %v1909
        %v2030 = vpop.f32.mrb[0].mxu0
        %v2031 = vadd.f32 0.0, %v2030
        %v2032 = vpop.f32.mrb[0].mxu0
        %2033 = vmatprep.mubr.f32.mxu0 0.0
        %2034 = vmatmul.mubr.f32.gmra.mrb[0].mxu0 %v1912
        %v2035 = vpop.f32.mrb[0].mxu0
        %v2036 = vadd.f32 0.0, %v2035
        %v2037 = vpop.f32.mrb[0].mxu0
        %2038 = vmatprep.mubr.f32.mxu0 0.0
        %2039 = vmatmul.mubr.f32.gmra.mrb[0].mxu0 %v1915
        %v2040 = vpop.f32.mrb[0].mxu0
        %v2041 = vadd.f32 0.0, %v2040
        %v2042 = vpop.f32.mrb[0].mxu0
        %2043 = vmatprep.mubr.f32.mxu0 0.0
        %2044 = vmatmul.mubr.f32.gmra.mrb[0].mxu0 %v1918
        %v2045 = vpop.f32.mrb[0].mxu0
        %v2046 = vadd.f32 0.0, %v2045
        %v2047 = vpop.f32.mrb[0].mxu0
        %2048 = vmatprep.mubr.f32.mxu0 0.0
        %2049 = vmatmul.mubr.f32.gmra.mrb[0].mxu0 %v1921
        %v2050 = vpop.f32.mrb[0].mxu0
        %v2051 = vadd.f32 0.0, %v2050
        %v2052 = vpop.f32.mrb[0].mxu0
        %2053 = vmatprep.mubr.f32.mxu0 0.0
        %2054 = vmatmul.mubr.f32.gmra.mrb[0].mxu0 %v1924
        %v2055 = vpop.f32.mrb[0].mxu0
        %v2056 = vadd.f32 0.0, %v2055
        %v2057 = vpop.f32.mrb[0].mxu0
        %2058 = vmatprep.mubr.f32.mxu0 0.0
        %2059 = vmatmul.mubr.f32.gmra.mrb[0].mxu0 %v1927
        %v2060 = vpop.f32.mrb[0].mxu0
        %v2061 = vadd.f32 0.0, %v2060
        %v2062 = vpop.f32.mrb[0].mxu0
        %2063 = vmatprep.mubr.f32.mxu0 0.0
        %2064 = vmatmul.mubr.f32.gmra.mrb[0].mxu0 %v1930
        %v2065 = vpop.f32.mrb[0].mxu0
        %v2066 = vadd.f32 0.0, %v2065
        %v2067 = vpop.f32.mrb[0].mxu0
        %2068 = vmatprep.mubr.f32.mxu0 0.0
        %2069 = vmatmul.mubr.f32.gmra.mrb[0].mxu0 %v1933
        %v2070 = vpop.f32.mrb[0].mxu0
        %v2071 = vadd.f32 0.0, %v2070
        %v2072 = vpop.f32.mrb[0].mxu0
        %2073 = vmatprep.mubr.f32.mxu0 0.0
        %2074 = vmatmul.mubr.f32.gmra.mrb[0].mxu0 %v1936
        %v2075 = vpop.f32.mrb[0].mxu0
        %v2076 = vadd.f32 0.0, %v2075
        %v2077 = vpop.f32.mrb[0].mxu0
        %2078 = vmatprep.mubr.f32.mxu0 0.0
        %2079 = vmatmul.mubr.f32.gmra.mrb[0].mxu0 %v1939
        %v2080 = vpop.f32.mrb[0].mxu0
        %v2081 = vadd.f32 0.0, %v2080
        %v2082 = vpop.f32.mrb[0].mxu0
        %2083 = vdwg.mxu0
        %v2084 = vadd.f32 %v1865, %v2011
        %v2085 = vadd.f32 %v1866, %v2016
        %v2086 = vadd.f32 %v1867, %v2021
        %v2087 = vadd.f32 %v1868, %v2026
        %v2088 = vadd.f32 %v1869, %v2031
        %v2089 = vadd.f32 %v1870, %v2036
        %v2090 = vadd.f32 %v1871, %v2041
        %v2091 = vadd.f32 %v1872, %v2046
        %v2092 = vadd.f32 %v1873, %v2051
        %v2093 = vadd.f32 %v1874, %v2056
        %v2094 = vadd.f32 %v1875, %v2061
        %v2095 = vadd.f32 %v1876, %v2066
        %v2096 = vadd.f32 %v1877, %v2071
        %v2097 = vadd.f32 %v1878, %v2076
        %v2098 = vadd.f32 %v1879, %v2081
        %v2099 = vld [vmem:[#allocation2 + $0x22] sm:$0xff]
        %v2100 = vld [vmem:[#allocation2 + $0x2a] sm:$0xff]
        %v2101 = vld [vmem:[#allocation2 + $0x32] sm:$0xff]
        %v2102 = vld [vmem:[#allocation2 + $0x3a] sm:$0xff]
        %v2103 = vld [vmem:[#allocation2 + $0x42] sm:$0xff]
        %v2104 = vld [vmem:[#allocation2 + $0x4a] sm:$0xff]
        %v2105 = vld [vmem:[#allocation2 + $0x52] sm:$0xff]
        %v2106 = vld [vmem:[#allocation2 + $0x5a] sm:$0xff]
        %v2107 = vld [vmem:[#allocation2 + $0x62] sm:$0xff]
        %v2108 = vld [vmem:[#allocation2 + $0x6a] sm:$0xff]
        %v2109 = vld [vmem:[#allocation2 + $0x72] sm:$0xff]
        %v2110 = vld [vmem:[#allocation2 + $0x7a] sm:$0xff]
        %v2111 = vld [vmem:[#allocation2 + $0x82] sm:$0xff]
        %v2112 = vld [vmem:[#allocation2 + $0x8a] sm:$0xff]
        %v2113 = vld [vmem:[#allocation2 + $0x92] sm:$0xff]
        %v2114 = vld [vmem:[%s2 + $0x20] sm:$0xf]
        %v2116 = vsel %vm350, %v2099, 0
        %v2119 = vsel %vm350, %v2100, 0
        %v2122 = vsel %vm350, %v2101, 0
        %v2125 = vsel %vm350, %v2102, 0
        %v2128 = vsel %vm350, %v2103, 0
        %v2131 = vsel %vm350, %v2104, 0
        %v2134 = vsel %vm350, %v2105, 0
        %v2137 = vsel %vm350, %v2106, 0
        %v2140 = vsel %vm350, %v2107, 0
        %v2143 = vsel %vm350, %v2108, 0
        %v2146 = vsel %vm350, %v2109, 0
        %v2149 = vsel %vm350, %v2110, 0
        %v2152 = vsel %vm350, %v2111, 0
        %v2155 = vsel %vm350, %v2112, 0
        %v2158 = vsel %vm350, %v2113, 0
        %v2161 = vsel %vm453, %v2114, 0
        %2163 = vmatprep.subr.mxu0 0.0
        %2164 = vmatpush1.msra.mxu0 %v2161
        %2165 = vmatprep.subr.mxu0 0.0
        %2166 = vmatpush1.msra.mxu0 0.0
        %2167 = vmatprep.subr.mxu0 0.0
        %2168 = vmatpush1.msra.mxu0 0.0
        %2169 = vmatprep.subr.mxu0 0.0
        %2170 = vmatpush1.msra.mxu0 0.0
        %2171 = vmatprep.subr.mxu0 0.0
        %2172 = vmatpush1.msra.mxu0 0.0
        %2173 = vmatprep.subr.mxu0 0.0
        %2174 = vmatpush1.msra.mxu0 0.0
        %2175 = vmatprep.subr.mxu0 0.0
        %2176 = vmatpush1.msra.mxu0 0.0
        %2177 = vmatprep.subr.mxu0 0.0
        %2178 = vmatpush1.msra.mxu0 0.0
        %2179 = vmatprep.subr.mxu0 0.0
        %2180 = vmatpush1.msra.mxu0 0.0
        %2181 = vmatprep.subr.mxu0 0.0
        %2182 = vmatpush1.msra.mxu0 0.0
        %2183 = vmatprep.subr.mxu0 0.0
        %2184 = vmatpush1.msra.mxu0 0.0
        %2185 = vmatprep.subr.mxu0 0.0
        %2186 = vmatpush1.msra.mxu0 0.0
        %2187 = vmatprep.subr.mxu0 0.0
        %2188 = vmatpush1.msra.mxu0 0.0
        %2189 = vmatprep.subr.mxu0 0.0
        %2190 = vmatpush1.msra.mxu0 0.0
        %2191 = vmatprep.subr.mxu0 0.0
        %2192 = vmatpush1.msra.mxu0 0.0
        %2193 = vmatprep.subr.mxu0 0.0
        %2194 = vmatpush1.msra.mxu0 0.0
        %2195 = vmatprep.subr.mxu0 0.0
        %2196 = vmatpush1.msra.mxu0 0.0
        %2197 = vmatprep.subr.mxu0 0.0
        %2198 = vmatpush1.msra.mxu0 0.0
        %2199 = vmatprep.subr.mxu0 0.0
        %2200 = vmatpush1.msra.mxu0 0.0
        %2201 = vmatprep.subr.mxu0 0.0
        %2202 = vmatpush1.msra.mxu0 0.0
        %2203 = vmatprep.subr.mxu0 0.0
        %2204 = vmatpush1.msra.mxu0 0.0
        %2205 = vmatprep.subr.mxu0 0.0
        %2206 = vmatpush1.msra.mxu0 0.0
        %2207 = vmatprep.subr.mxu0 0.0
        %2208 = vmatpush1.msra.mxu0 0.0
        %2209 = vmatprep.subr.mxu0 0.0
        %2210 = vmatpush1.msra.mxu0 0.0
        %2211 = vmatprep.subr.mxu0 0.0
        %2212 = vmatpush1.msra.mxu0 0.0
        %2213 = vmatprep.subr.mxu0 0.0
        %2214 = vmatpush1.msra.mxu0 0.0
        %2215 = vmatprep.subr.mxu0 0.0
        %2216 = vmatpush1.msra.mxu0 0.0
        %2217 = vmatprep.subr.mxu0 0.0
        %2218 = vmatpush1.msra.mxu0 0.0
        %2219 = vmatprep.subr.mxu0 0.0
        %2220 = vmatpush1.msra.mxu0 0.0
        %2221 = vmatprep.subr.mxu0 0.0
        %2222 = vmatpush1.msra.mxu0 0.0
        %2223 = vmatprep.subr.mxu0 0.0
        %2224 = vmatpush1.msra.mxu0 0.0
        %2225 = vmatprep.subr.mxu0 0.0
        %2226 = vmatpush1.msra.mxu0 0.0
        %2227 = vmatprep.mubr.f32.mxu0 0.0
        %2228 = vmatmul.mubr.f32.gmra.mrb[0].mxu0 %v2116
        %v2229 = vpop.f32.mrb[0].mxu0
        %v2230 = vadd.f32 0.0, %v2229
        %v2231 = vpop.f32.mrb[0].mxu0
        %2232 = vmatprep.mubr.f32.mxu0 0.0
        %2233 = vmatmul.mubr.f32.gmra.mrb[0].mxu0 %v2119
        %v2234 = vpop.f32.mrb[0].mxu0
        %v2235 = vadd.f32 0.0, %v2234
        %v2236 = vpop.f32.mrb[0].mxu0
        %2237 = vmatprep.mubr.f32.mxu0 0.0
        %2238 = vmatmul.mubr.f32.gmra.mrb[0].mxu0 %v2122
        %v2239 = vpop.f32.mrb[0].mxu0
        %v2240 = vadd.f32 0.0, %v2239
        %v2241 = vpop.f32.mrb[0].mxu0
        %2242 = vmatprep.mubr.f32.mxu0 0.0
        %2243 = vmatmul.mubr.f32.gmra.mrb[0].mxu0 %v2125
        %v2244 = vpop.f32.mrb[0].mxu0
        %v2245 = vadd.f32 0.0, %v2244
        %v2246 = vpop.f32.mrb[0].mxu0
        %2247 = vmatprep.mubr.f32.mxu0 0.0
        %2248 = vmatmul.mubr.f32.gmra.mrb[0].mxu0 %v2128
        %v2249 = vpop.f32.mrb[0].mxu0
        %v2250 = vadd.f32 0.0, %v2249
        %v2251 = vpop.f32.mrb[0].mxu0
        %2252 = vmatprep.mubr.f32.mxu0 0.0
        %2253 = vmatmul.mubr.f32.gmra.mrb[0].mxu0 %v2131
        %v2254 = vpop.f32.mrb[0].mxu0
        %v2255 = vadd.f32 0.0, %v2254
        %v2256 = vpop.f32.mrb[0].mxu0
        %2257 = vmatprep.mubr.f32.mxu0 0.0
        %2258 = vmatmul.mubr.f32.gmra.mrb[0].mxu0 %v2134
        %v2259 = vpop.f32.mrb[0].mxu0
        %v2260 = vadd.f32 0.0, %v2259
        %v2261 = vpop.f32.mrb[0].mxu0
        %2262 = vmatprep.mubr.f32.mxu0 0.0
        %2263 = vmatmul.mubr.f32.gmra.mrb[0].mxu0 %v2137
        %v2264 = vpop.f32.mrb[0].mxu0
        %v2265 = vadd.f32 0.0, %v2264
        %v2266 = vpop.f32.mrb[0].mxu0
        %2267 = vmatprep.mubr.f32.mxu0 0.0
        %2268 = vmatmul.mubr.f32.gmra.mrb[0].mxu0 %v2140
        %v2269 = vpop.f32.mrb[0].mxu0
        %v2270 = vadd.f32 0.0, %v2269
        %v2271 = vpop.f32.mrb[0].mxu0
        %2272 = vmatprep.mubr.f32.mxu0 0.0
        %2273 = vmatmul.mubr.f32.gmra.mrb[0].mxu0 %v2143
        %v2274 = vpop.f32.mrb[0].mxu0
        %v2275 = vadd.f32 0.0, %v2274
        %v2276 = vpop.f32.mrb[0].mxu0
        %2277 = vmatprep.mubr.f32.mxu0 0.0
        %2278 = vmatmul.mubr.f32.gmra.mrb[0].mxu0 %v2146
        %v2279 = vpop.f32.mrb[0].mxu0
        %v2280 = vadd.f32 0.0, %v2279
        %v2281 = vpop.f32.mrb[0].mxu0
        %2282 = vmatprep.mubr.f32.mxu0 0.0
        %2283 = vmatmul.mubr.f32.gmra.mrb[0].mxu0 %v2149
        %v2284 = vpop.f32.mrb[0].mxu0
        %v2285 = vadd.f32 0.0, %v2284
        %v2286 = vpop.f32.mrb[0].mxu0
        %2287 = vmatprep.mubr.f32.mxu0 0.0
        %2288 = vmatmul.mubr.f32.gmra.mrb[0].mxu0 %v2152
        %v2289 = vpop.f32.mrb[0].mxu0
        %v2290 = vadd.f32 0.0, %v2289
        %v2291 = vpop.f32.mrb[0].mxu0
        %2292 = vmatprep.mubr.f32.mxu0 0.0
        %2293 = vmatmul.mubr.f32.gmra.mrb[0].mxu0 %v2155
        %v2294 = vpop.f32.mrb[0].mxu0
        %v2295 = vadd.f32 0.0, %v2294
        %v2296 = vpop.f32.mrb[0].mxu0
        %2297 = vmatprep.mubr.f32.mxu0 0.0
        %2298 = vmatmul.mubr.f32.gmra.mrb[0].mxu0 %v2158
        %v2299 = vpop.f32.mrb[0].mxu0
        %v2300 = vadd.f32 0.0, %v2299
        %v2301 = vpop.f32.mrb[0].mxu0
        %2302 = vdwg.mxu0
        %v2303 = vadd.f32 %v2084, %v2230
        %v2304 = vadd.f32 %v2085, %v2235
        %v2305 = vadd.f32 %v2086, %v2240
        %v2306 = vadd.f32 %v2087, %v2245
        %v2307 = vadd.f32 %v2088, %v2250
        %v2308 = vadd.f32 %v2089, %v2255
        %v2309 = vadd.f32 %v2090, %v2260
        %v2310 = vadd.f32 %v2091, %v2265
        %v2311 = vadd.f32 %v2092, %v2270
        %v2312 = vadd.f32 %v2093, %v2275
        %v2313 = vadd.f32 %v2094, %v2280
        %v2314 = vadd.f32 %v2095, %v2285
        %v2315 = vadd.f32 %v2096, %v2290
        %v2316 = vadd.f32 %v2097, %v2295
        %v2317 = vadd.f32 %v2098, %v2300
        %v2318 = vld [vmem:[%s3] sm:$0x1]
        %v2320 = vlaneseq
        %v2321 = vshrl.u32 %v2320, 7
        %v2322 = vsub.s32 0, %v2321
        %v2323 = vrot.slane %v2318, %v2322
        %v2325 = vadd.f32 %v2303, %v2323
        %v2326 = vadd.f32 %v2304, %v2323
        %v2327 = vadd.f32 %v2305, %v2323
        %v2328 = vadd.f32 %v2306, %v2323
        %v2329 = vadd.f32 %v2307, %v2323
        %v2330 = vadd.f32 %v2308, %v2323
        %v2331 = vadd.f32 %v2309, %v2323
        %v2332 = vadd.f32 %v2310, %v2323
        %v2333 = vadd.f32 %v2311, %v2323
        %v2334 = vadd.f32 %v2312, %v2323
        %v2335 = vadd.f32 %v2313, %v2323
        %v2336 = vadd.f32 %v2314, %v2323
        %v2337 = vadd.f32 %v2315, %v2323
        %v2338 = vadd.f32 %v2316, %v2323
        %v2339 = vadd.f32 %v2317, %v2323
        %2340 = vst [vmem:[%s285] sm:$0xff] %v2325
        %2341 = vst [vmem:[%s285 + $0x8] sm:$0xff] %v2326
        %2342 = vst [vmem:[%s285 + $0x10] sm:$0xff] %v2327
        %2343 = vst [vmem:[%s285 + $0x18] sm:$0xff] %v2328
        %2344 = vst [vmem:[%s285 + $0x20] sm:$0xff] %v2329
        %2345 = vst [vmem:[%s285 + $0x28] sm:$0xff] %v2330
        %2346 = vst [vmem:[%s285 + $0x30] sm:$0xff] %v2331
        %2347 = vst [vmem:[%s285 + $0x38] sm:$0xff] %v2332
        %2348 = vst [vmem:[%s285 + $0x40] sm:$0xff] %v2333
        %2349 = vst [vmem:[%s285 + $0x48] sm:$0xff] %v2334
        %2350 = vst [vmem:[%s285 + $0x50] sm:$0xff] %v2335
        %2351 = vst [vmem:[%s285 + $0x58] sm:$0xff] %v2336
        %2352 = vst [vmem:[%s285 + $0x60] sm:$0xff] %v2337
        %2353 = vst [vmem:[%s285 + $0x68] sm:$0xff] %v2338
        %2354 = vst [vmem:[%s285 + $0x70] sm:$0xff] %v2339
        %s2355 = sand.u32 %s146, 1
        %s2356 = scalar_lea.sflag [#allocation4], %s2355
        %s2357 = sand.u32 %s146, 1
        %s2358 = smul.addr %s2357, 120
        %s2359 = scalar_lea.vmem [#allocation3], %s2358
        // Predicated region
        $region37: #{tpu_custom_call.1} parent=35 // pred_check
          %p2360 = pneg %p156
        $region38: #{tpu_custom_call.1} parent=35 // pred_check_branch
          %2362 = sbr.rel (%p2360) target = $region40
        $region39: #{tpu_custom_call.1} parent=35 // pred_region
          %s2363 = smul.u32 15, %s23
          %s2364 = ssub.s32 28, %s2363
          %p2365 = scmp.lt.s32.totalorder %s2364, 15
          %s2366 = scalar_select %p2365, %s2364, 15
          %s2367 = smul.u32 128, %s2366
          %s2369 = ssub.s32 1920, %s2367
          %2370 = vsyncadd %s2356, %s2369
          %p2371 = scmp.ne.s32.totalorder 0, %s2367
          %s2372 = smul.addr %s22, 28
          %s2373 = sadd.s32 %s2363, %s2372
          %s2374 = smul.addr %s2373, 128
          %s2375 = scalar_lea.hbm %s4, %s2374
          %s2376 = smul.u32 8, %s2366
          %s2377 = sshll.u32 %s2359, 4
          %s2378 = int_to_ptr.vmem [resolvable:$true] %s2377
          %s2379 = sshll.u32 %s2376, 4
          %2383 = dma.vmem_to_hbm [thread:$0]  (%p2371), %s2378, %s2379, %s2375, %s2356, 128, 128, 8
        $region40: #{tpu_custom_call.1} parent=35 // pred_fallthru
          _
      $region36: #{tpu_custom_call.1} parent=5 // pred_fallthru
        _
      %p2384 = scmp.le.s32.totalorder 2, %s13
      // Predicated region
      $region41: #{tpu_custom_call.1} parent=5 // pred_check
        %p2385 = pneg %p2384
      $region42: #{tpu_custom_call.1} parent=5 // pred_check_branch
        %2387 = sbr.rel (%p2385) target = $region44
      $region43: #{tpu_custom_call.1} parent=5 // pred_region
        %s2388 = ssub.s32 %s13, 2
        // Predicated region
        $region45: #{tpu_custom_call.1} parent=43 // pred_check
          %p2389 = pneg %p162
        $region46: #{tpu_custom_call.1} parent=43 // pred_check_branch
          %2391 = sbr.rel (%p2389) target = $region48
        $region47: #{tpu_custom_call.1} parent=43 // pred_region
          %s2392 = sand.u32 %s147, 1
          %s2393 = scalar_lea.sflag [#allocation4], %s2392
          %s2394 = sand.u32 %s147, 1
          %s2395 = smul.addr %s2394, 120
          %s2396 = scalar_lea.vmem [#allocation3], %s2395
          %2397 = dma.done %s2393, 1920
        $region48: #{tpu_custom_call.1} parent=43 // pred_fallthru
          _
      $region44: #{tpu_custom_call.1} parent=5 // pred_fallthru
        _
    $region6: #{tpu_custom_call.1} parent=1 // loop_footer
      %s17 = sadd.s32 1, %s13
    $region7: #{tpu_custom_call.1} parent=1 // loop_footer_branch
      %12 = sbr.rel target = $region3
    $region8: #{tpu_custom_call.1} parent=1 // loop_exit
      _
    %2398 = vsyncpa [#allocation4], 1
    %s2399 = scalar_lea.sflag [#allocation4], 1
    %2400 = vsyncpa %s2399, 1

</llo_original>
